<compile_context>
chip_gen: v7x
topology: tpu7x:2x2x1
jax: 0.10.0
libtpu: 0.0.40
codegen_flags: <defaults>
</compile_context>

<pallas_src>
import functools

import jax
import jax.numpy as jnp
from jax import lax
from jax.experimental import pallas as pl
from jax.experimental.pallas import tpu as pltpu

BN_EPS = 1e-5
COS_EPS = 1e-8


def _pred_mlp_kernel(z1_ref, z2_ref, w1_ref, w2_ref, b2_ref,     # inputs
                     out_ref,                                     # output (SMEM, (4,))
                     bn_s1, bn_q1, bn_s2, bn_q2, acc,             # scratch
                     *, mm_dtype, n_total):
    pass_idx = pl.program_id(0)
    tile_idx = pl.program_id(1)
    n_tiles = pl.num_programs(1)

    c_in = z1_ref.shape[1]
    inv_n = 1.0 / float(n_total)
    inv_cm1 = (1.0 / float(c_in - 1)) if c_in > 1 else float("nan")

    # ------------------------------------------------------------------ init
    @pl.when(jnp.logical_and(pass_idx == 0, tile_idx == 0))
    def _init():
        bn_s1[...] = jnp.zeros_like(bn_s1)
        bn_q1[...] = jnp.zeros_like(bn_q1)
        bn_s2[...] = jnp.zeros_like(bn_s2)
        bn_q2[...] = jnp.zeros_like(bn_q2)
        for k in range(acc.shape[0]):
            acc[k] = jnp.float32(0.0)
        for k in range(out_ref.shape[0]):
            out_ref[k] = jnp.float32(0.0)

    # MXU operands (bf16 in, f32 accumulate); z tiles may already be bf16.
    z1m = z1_ref[...].astype(mm_dtype)
    z2m = z2_ref[...].astype(mm_dtype)

    # --------------------------------------- pass 0: h = z @ w1 + BN statistics
    @pl.when(pass_idx == 0)
    def _pass0():
        # Two back-to-back dots with the same resident RHS (no concatenate copy).
        h1 = jnp.dot(z1m, w1_ref[...], preferred_element_type=jnp.float32)
        h2 = jnp.dot(z2m, w1_ref[...], preferred_element_type=jnp.float32)
        bn_s1[...] += jnp.sum(h1, axis=0, keepdims=True)
        bn_q1[...] += jnp.sum(h1 * h1, axis=0, keepdims=True)
        bn_s2[...] += jnp.sum(h2, axis=0, keepdims=True)
        bn_q2[...] += jnp.sum(h2 * h2, axis=0, keepdims=True)

    # ------- pass 1: recompute h, BN + ReLU, p = a @ w2 + b2, loss/stat reductions
    @pl.when(pass_idx == 1)
    def _pass1():
        # Full-batch BatchNorm statistics (training mode: biased variance).
        mu1 = bn_s1[...] * inv_n
        mu2 = bn_s2[...] * inv_n
        var1 = jnp.maximum(bn_q1[...] * inv_n - mu1 * mu1, 0.0)
        var2 = jnp.maximum(bn_q2[...] * inv_n - mu2 * mu2, 0.0)
        inv_std1 = lax.rsqrt(var1 + BN_EPS)
        inv_std2 = lax.rsqrt(var2 + BN_EPS)

        # Recompute h instead of staging a (2N, hid) f32 scratch: the kernel is
        # HBM-bound, so the extra matmul hides under the z DMA and VMEM stays
        # O(tile) instead of O(batch).
        h1 = jnp.dot(z1m, w1_ref[...], preferred_element_type=jnp.float32)
        h2 = jnp.dot(z2m, w1_ref[...], preferred_element_type=jnp.float32)
        a1 = jnp.maximum((h1 - mu1) * inv_std1, 0.0).astype(mm_dtype)
        a2 = jnp.maximum((h2 - mu2) * inv_std2, 0.0).astype(mm_dtype)

        b2v = b2_ref[...].astype(jnp.float32)
        p1 = jnp.dot(a1, w2_ref[...], preferred_element_type=jnp.float32) + b2v
        p2 = jnp.dot(a2, w2_ref[...], preferred_element_type=jnp.float32) + b2v

        z1f = z1_ref[...].astype(jnp.float32)
        z2f = z2_ref[...].astype(jnp.float32)

        def neg_cos(pv, zv):
            # -F.cosine_similarity(p, z): -dot * rsqrt(max(|p|^2*|z|^2, eps^2))
            # (rsqrt keeps this on the EUP slot, no divide / extra transcendental)
            num = jnp.sum(pv * zv, axis=-1, keepdims=True)
            den2 = jnp.maximum(
                jnp.sum(pv * pv, axis=-1, keepdims=True)
                * jnp.sum(zv * zv, axis=-1, keepdims=True),
                COS_EPS * COS_EPS)
            return -(num * lax.rsqrt(den2))

        sim1 = neg_cos(p1, z2f)           # (tn, 1)
        sim2 = neg_cos(p2, z1f)

        acc[0] += jnp.sum(sim1)
        acc[1] += jnp.sum(sim2)
        acc[2] += jnp.sum(sim1 * sim1)

        # z1 per-row channel statistics (original input values, f32 math).
        row_mean = jnp.mean(z1f, axis=-1, keepdims=True)             # (tn, 1)
        cen = z1f - row_mean
        row_var = jnp.sum(cen * cen, axis=-1, keepdims=True) * inv_cm1
        acc[3] += jnp.sum(jnp.sqrt(row_var))
        acc[4] += jnp.sum(row_mean)

        # ------------------------------------------ finalize on the last tile
        @pl.when(tile_idx == n_tiles - 1)
        def _finalize():
            s1 = acc[0]
            s2 = acc[1]
            sq1 = acc[2]
            mean1 = s1 * inv_n
            loss = 0.5 * mean1 + 0.5 * (s2 * inv_n)
            if n_total > 1:
                # unbiased var of sim1: (sum(x^2) - N*mean^2) / (N-1)
                sim_var = jnp.maximum(sq1 - s1 * mean1, 0.0) * (1.0 / float(n_total - 1))
            else:
                sim_var = jnp.float32(jnp.nan)   # torch .var() of one element
            out_ref[0] = loss
            out_ref[1] = sim_var
            out_ref[2] = acc[3] * inv_n
            out_ref[3] = acc[4] * inv_n


def _tpu_vmem_capacity_bytes():
    try:
        return int(pltpu.get_tpu_info().vmem_capacity_bytes)
    except Exception:
        return 64 * 1024 * 1024   # conservative floor (v7x per-TC VMEM)


def _estimate_vmem_bytes(tile_n, c_in, hid, c_out, z_itemsize, w_itemsize):
    pad_hid = ((hid + 127) // 128) * 128
    est = 2 * (c_in * hid + hid * c_out) * w_itemsize     # w1/w2 (assume 2x buffered)
    est += 2 * c_out * 4                                  # b2
    est += 2 * 2 * tile_n * c_in * z_itemsize             # z1/z2 double-buffered tiles
    est += 4 * 8 * pad_hid * 4                            # BN sum/sumsq scratch (padded)
    # live in-kernel intermediates: h1/h2 (f32), a1/a2 (mm), p1/p2 (f32),
    # f32 copies of the z tiles for cosine / statistics math.
    est += tile_n * (2 * hid * 4 + 2 * hid * w_itemsize + 4 * c_out * 4
                     + 2 * c_in * 4 + 32)
    return int(est)


def pred_mlp_forward(z1, z2, w1, w2, b2, *, tile_n=None, use_bf16_matmul=True,
                     cast_inputs_bf16=True):
    """Returns dict with 'loss', 'sim_var', 'output_std', 'output_mean' (scalars)."""
    n, c_in = z1.shape
    c_in_w, hid = w1.shape
    hid_w, c_out = w2.shape
    assert z2.shape == (n, c_in)
    assert c_in_w == c_in and hid_w == hid

    mm_dtype = jnp.bfloat16 if use_bf16_matmul else jnp.float32
    # z1/z2 are each streamed from HBM twice (once per pass); shipping them as
    # bf16 halves the dominant HBM-traffic term of this memory-bound kernel.
    if use_bf16_matmul and cast_inputs_bf16:
        z1c = z1.astype(jnp.bfloat16)
        z2c = z2.astype(jnp.bfloat16)
    else:
        z1c = z1
        z2c = z2
    w1c = w1.astype(mm_dtype)
    w2c = w2.astype(mm_dtype)
    b2c = jnp.reshape(b2, (1, c_out)).astype(jnp.float32)

    zb = jnp.dtype(z1c.dtype).itemsize
    wb = jnp.dtype(mm_dtype).itemsize

    vmem_cap = _tpu_vmem_capacity_bytes()
    if tile_n is None:
        budget = int(0.6 * vmem_cap)
        cands = [t for t in (1024, 512, 256, 128, 64, 32, 16, 8)
                 if t <= n and n % t == 0]
        if not cands:
            cands = [n]           # block == full batch dim (legal for any n)
        tile_n = cands[-1]
        for cand in cands:
            if _estimate_vmem_bytes(cand, c_in, hid, c_out, zb, wb) <= budget:
                tile_n = cand
                break
    tile_n = min(tile_n, n)
    assert n % tile_n == 0, "batch size must be divisible by tile_n"
    assert tile_n == n or tile_n % 8 == 0, (
        "tile_n must be a multiple of 8 (sublane tiling) or the full batch")
    n_tiles = n // tile_n

    vmem_est = _estimate_vmem_bytes(tile_n, c_in, hid, c_out, zb, wb)
    # Leave headroom for compiler-internal scratch / pipeline buffers:
    # ~85% of physical VMEM (=> ~54 MiB on v7x, ~108 MiB on v5e/v6e).
    vmem_limit = int(min(max(2 * vmem_est, 32 * 1024 * 1024),
                         int(0.85 * vmem_cap)))

    # 2 paths; the first matmul is executed in both passes (recompute).
    flops = 2 * (2 * (2 * n * c_in * hid) + 2 * n * hid * c_out)
    transcendentals = 3 * n + 2 * hid * n_tiles
    bytes_accessed = (2 * (z1c.size * zb + z2c.size * zb)
                      + w1c.size * wb + w2c.size * wb + b2c.size * 4 + 16)

    kernel = functools.partial(_pred_mlp_kernel, mm_dtype=mm_dtype, n_total=n)

    out = pl.pallas_call(
        kernel,
        out_shape=jax.ShapeDtypeStruct((4,), jnp.float32),
        grid_spec=pltpu.PrefetchScalarGridSpec(
            num_scalar_prefetch=0,
            grid=(2, n_tiles),                                       # (pass, batch tile)
            in_specs=[
                pl.BlockSpec((tile_n, c_in), lambda p, i: (i, 0)),   # z1 tile
                pl.BlockSpec((tile_n, c_in), lambda p, i: (i, 0)),   # z2 tile
                pl.BlockSpec((c_in, hid), lambda p, i: (0, 0)),      # w1 (resident)
                pl.BlockSpec((hid, c_out), lambda p, i: (0, 0)),     # w2 (resident)
                pl.BlockSpec((1, c_out), lambda p, i: (0, 0)),       # b2 (resident)
            ],
            out_specs=pl.BlockSpec(memory_space=pltpu.MemorySpace.SMEM),
            scratch_shapes=[
                pltpu.VMEM((1, hid), jnp.float32),       # BN sum   (z1 path)
                pltpu.VMEM((1, hid), jnp.float32),       # BN sumsq (z1 path)
                pltpu.VMEM((1, hid), jnp.float32),       # BN sum   (z2 path)
                pltpu.VMEM((1, hid), jnp.float32),       # BN sumsq (z2 path)
                pltpu.SMEM((8,), jnp.float32),           # scalar accumulators
            ],
        ),
        compiler_params=pltpu.CompilerParams(
            dimension_semantics=("arbitrary", "arbitrary"),
            vmem_limit_bytes=vmem_limit,
        ),
        cost_estimate=pl.CostEstimate(
            flops=int(flops),
            transcendentals=int(transcendentals),
            bytes_accessed=int(bytes_accessed),
        ),
    )(z1c, z2c, w1c, w2c, b2c)

    return {
        "loss": out[0],
        "sim_var": out[1],
        "output_std": out[2],
        "output_mean": out[3],
    }


def make_params(key, in_channels, hidden_channels, out_channels):
    k1, k2, k3 = jax.random.split(key, 3)
    w1 = jax.random.uniform(
        k1, (in_channels, hidden_channels), jnp.float32,
        minval=-1.0, maxval=1.0) / jnp.sqrt(jnp.float32(in_channels))
    w2 = jax.random.uniform(
        k2, (hidden_channels, out_channels), jnp.float32,
        minval=-1.0, maxval=1.0) / jnp.sqrt(jnp.float32(hidden_channels))
    b2 = jax.random.uniform(
        k3, (1, out_channels), jnp.float32,
        minval=-1.0, maxval=1.0) / jnp.sqrt(jnp.float32(hidden_channels))
    return w1, w2, b2


def _reference_forward(z1, z2, w1, w2, b2):
    """Pure-JAX f32 reference mirroring the torch module (for sanity checking)."""
    z1 = z1.astype(jnp.float32)
    z2 = z2.astype(jnp.float32)
    w1 = w1.astype(jnp.float32)
    w2 = w2.astype(jnp.float32)
    b2 = jnp.reshape(b2, (1, -1)).astype(jnp.float32)

    def layer(x):
        h = x @ w1
        mu = jnp.mean(h, axis=0, keepdims=True)
        var = jnp.mean((h - mu) ** 2, axis=0, keepdims=True)
        h = (h - mu) * lax.rsqrt(var + BN_EPS)
        h = jnp.maximum(h, 0.0)
        return h @ w2 + b2

    p1 = layer(z1)
    p2 = layer(z2)

    def neg_cos(p, z):
        num = jnp.sum(p * z, axis=-1)
        den = jnp.sqrt(jnp.maximum(
            jnp.sum(p * p, axis=-1) * jnp.sum(z * z, axis=-1), COS_EPS * COS_EPS))
        return -num / den

    sim1 = neg_cos(p1, z2)
    sim2 = neg_cos(p2, z1)
    n = z1.shape[0]
    c = z1.shape[1]
    loss = 0.5 * jnp.mean(sim1) + 0.5 * jnp.mean(sim2)
    sim_var = jnp.sum((sim1 - jnp.mean(sim1)) ** 2) / (n - 1)
    row_mean = jnp.mean(z1, axis=1)
    row_var = jnp.sum((z1 - row_mean[:, None]) ** 2, axis=1) / (c - 1)
    return {
        "loss": loss,
        "sim_var": sim_var,
        "output_std": jnp.mean(jnp.sqrt(row_var)),
        "output_mean": jnp.mean(row_mean),
    }


if __name__ == "__main__":
    # Small, lane-aligned shapes consistent with the module (default 2048/512/2048).
    N, IN_C, HID_C, OUT_C = 64, 256, 128, 256

    key = jax.random.PRNGKey(0)
    kz1, kz2, kp = jax.random.split(key, 3)
    z1 = jax.random.normal(kz1, (N, IN_C), jnp.float32)
    z2 = jax.random.normal(kz2, (N, IN_C), jnp.float32)
    w1, w2, b2 = make_params(kp, IN_C, HID_C, OUT_C)

    ref = _reference_forward(z1, z2, w1, w2, b2)

    # (a) explicit tile_n=32 so the (pass, tile) grid actually iterates (2 x 2);
    # (b) auto-tiled (single batch tile at this size) to exercise tile selection.
    for kwargs in ({"tile_n": 32}, {}):
        losses = pred_mlp_forward(z1, z2, w1, w2, b2, **kwargs)
        losses = jax.block_until_ready(losses)
        # Loose sanity check against the pure-JAX f32 reference (bf16 z / bf16
        # MXU inputs introduce ~1e-3-level differences).
        for name in ("loss", "sim_var", "output_std", "output_mean"):
            got = float(losses[name])
            want = float(ref[name])
            assert abs(got - want) <= 0.02 + 0.05 * abs(want), (name, got, want)

    print("KERNEL_OK")
</pallas_src>

<mosaic_0001>
module attributes {stable_mosaic.version = 11 : i64} {
  func.func @_pred_mlp_kernel(%arg0: i32, %arg1: i32, %arg2: memref<32x256xbf16, #tpu.memory_space<vmem>>, %arg3: memref<32x256xbf16, #tpu.memory_space<vmem>>, %arg4: memref<256x128xbf16, #tpu.memory_space<vmem>>, %arg5: memref<128x256xbf16, #tpu.memory_space<vmem>>, %arg6: memref<1x256xf32, #tpu.memory_space<vmem>>, %arg7: memref<4xf32, #tpu.memory_space<smem>>, %arg8: memref<1x128xf32, #tpu.memory_space<vmem>>, %arg9: memref<1x128xf32, #tpu.memory_space<vmem>>, %arg10: memref<1x128xf32, #tpu.memory_space<vmem>>, %arg11: memref<1x128xf32, #tpu.memory_space<vmem>>, %arg12: memref<8xf32, #tpu.memory_space<smem>>) attributes {dimension_semantics = [#tpu.dimension_semantics<arbitrary>, #tpu.dimension_semantics<arbitrary>], iteration_bounds = array<i64: 2, 2>, scalar_prefetch = 0 : i64, scratch_operands = 5 : i64, tpu.core_type = #tpu.core_type<tc>, window_params = [{transform_indices = @transform_0, window_bounds = array<i64: 32, 256>}, {transform_indices = @transform_1, window_bounds = array<i64: 32, 256>}, {pipeline_mode = #tpu.pipeline_mode<synchronous>, transform_indices = @transform_2, window_bounds = array<i64: 256, 128>}, {pipeline_mode = #tpu.pipeline_mode<synchronous>, transform_indices = @transform_3, window_bounds = array<i64: 128, 256>}, {pipeline_mode = #tpu.pipeline_mode<synchronous>, transform_indices = @transform_4, window_bounds = array<i64: 1, 256>}, {transform_indices = @transform_5, window_bounds = array<i64: 4>}]} {
    %c0_i32 = arith.constant 0 : i32
    %0 = arith.cmpi eq, %arg0, %c0_i32 : i32
    %c0_i32_0 = arith.constant 0 : i32
    %1 = arith.cmpi eq, %arg1, %c0_i32_0 : i32
    %2 = arith.andi %0, %1 : i1
    %3 = arith.extui %2 : i1 to i32
    %c0_i32_1 = arith.constant 0 : i32
    %4 = arith.cmpi ne, %3, %c0_i32_1 : i32
    scf.if %4 {
      %cst = arith.constant 0.000000e+00 : f32
      %13 = vector.broadcast %cst : f32 to vector<1x128xf32>
      %c0_8 = arith.constant 0 : index
      %c0_9 = arith.constant 0 : index
      %14 = vector.load %arg8[%c0_8, %c0_9] : memref<1x128xf32, #tpu.memory_space<vmem>>, vector<1x128xf32>
      tpu.vector_store %arg8[%c0_8, %c0_9], %13 {strides = array<i32>} : memref<1x128xf32, #tpu.memory_space<vmem>>, vector<1x128xf32>,
      %cst_10 = arith.constant 0.000000e+00 : f32
      %15 = vector.broadcast %cst_10 : f32 to vector<1x128xf32>
      %c0_11 = arith.constant 0 : index
      %c0_12 = arith.constant 0 : index
      %16 = vector.load %arg9[%c0_11, %c0_12] : memref<1x128xf32, #tpu.memory_space<vmem>>, vector<1x128xf32>
      tpu.vector_store %arg9[%c0_11, %c0_12], %15 {strides = array<i32>} : memref<1x128xf32, #tpu.memory_space<vmem>>, vector<1x128xf32>,
      %cst_13 = arith.constant 0.000000e+00 : f32
      %17 = vector.broadcast %cst_13 : f32 to vector<1x128xf32>
      %c0_14 = arith.constant 0 : index
      %c0_15 = arith.constant 0 : index
      %18 = vector.load %arg10[%c0_14, %c0_15] : memref<1x128xf32, #tpu.memory_space<vmem>>, vector<1x128xf32>
      tpu.vector_store %arg10[%c0_14, %c0_15], %17 {strides = array<i32>} : memref<1x128xf32, #tpu.memory_space<vmem>>, vector<1x128xf32>,
      %cst_16 = arith.constant 0.000000e+00 : f32
      %19 = vector.broadcast %cst_16 : f32 to vector<1x128xf32>
      %c0_17 = arith.constant 0 : index
      %c0_18 = arith.constant 0 : index
      %20 = vector.load %arg11[%c0_17, %c0_18] : memref<1x128xf32, #tpu.memory_space<vmem>>, vector<1x128xf32>
      tpu.vector_store %arg11[%c0_17, %c0_18], %19 {strides = array<i32>} : memref<1x128xf32, #tpu.memory_space<vmem>>, vector<1x128xf32>,
      %cst_19 = arith.constant 0.000000e+00 : f32
      %c0_20 = arith.constant 0 : index
      %21 = memref.load %arg12[%c0_20] : memref<8xf32, #tpu.memory_space<smem>>
      memref.store %cst_19, %arg12[%c0_20] : memref<8xf32, #tpu.memory_space<smem>>
      %cst_21 = arith.constant 0.000000e+00 : f32
      %c1 = arith.constant 1 : index
      %22 = memref.load %arg12[%c1] : memref<8xf32, #tpu.memory_space<smem>>
      memref.store %cst_21, %arg12[%c1] : memref<8xf32, #tpu.memory_space<smem>>
      %cst_22 = arith.constant 0.000000e+00 : f32
      %c2 = arith.constant 2 : index
      %23 = memref.load %arg12[%c2] : memref<8xf32, #tpu.memory_space<smem>>
      memref.store %cst_22, %arg12[%c2] : memref<8xf32, #tpu.memory_space<smem>>
      %cst_23 = arith.constant 0.000000e+00 : f32
      %c3 = arith.constant 3 : index
      %24 = memref.load %arg12[%c3] : memref<8xf32, #tpu.memory_space<smem>>
      memref.store %cst_23, %arg12[%c3] : memref<8xf32, #tpu.memory_space<smem>>
      %cst_24 = arith.constant 0.000000e+00 : f32
      %c4 = arith.constant 4 : index
      %25 = memref.load %arg12[%c4] : memref<8xf32, #tpu.memory_space<smem>>
      memref.store %cst_24, %arg12[%c4] : memref<8xf32, #tpu.memory_space<smem>>
      %cst_25 = arith.constant 0.000000e+00 : f32
      %c5 = arith.constant 5 : index
      %26 = memref.load %arg12[%c5] : memref<8xf32, #tpu.memory_space<smem>>
      memref.store %cst_25, %arg12[%c5] : memref<8xf32, #tpu.memory_space<smem>>
      %cst_26 = arith.constant 0.000000e+00 : f32
      %c6 = arith.constant 6 : index
      %27 = memref.load %arg12[%c6] : memref<8xf32, #tpu.memory_space<smem>>
      memref.store %cst_26, %arg12[%c6] : memref<8xf32, #tpu.memory_space<smem>>
      %cst_27 = arith.constant 0.000000e+00 : f32
      %c7 = arith.constant 7 : index
      %28 = memref.load %arg12[%c7] : memref<8xf32, #tpu.memory_space<smem>>
      memref.store %cst_27, %arg12[%c7] : memref<8xf32, #tpu.memory_space<smem>>
      %cst_28 = arith.constant 0.000000e+00 : f32
      %c0_29 = arith.constant 0 : index
      %29 = memref.load %arg7[%c0_29] : memref<4xf32, #tpu.memory_space<smem>>
      memref.store %cst_28, %arg7[%c0_29] : memref<4xf32, #tpu.memory_space<smem>>
      %cst_30 = arith.constant 0.000000e+00 : f32
      %c1_31 = arith.constant 1 : index
      %30 = memref.load %arg7[%c1_31] : memref<4xf32, #tpu.memory_space<smem>>
      memref.store %cst_30, %arg7[%c1_31] : memref<4xf32, #tpu.memory_space<smem>>
      %cst_32 = arith.constant 0.000000e+00 : f32
      %c2_33 = arith.constant 2 : index
      %31 = memref.load %arg7[%c2_33] : memref<4xf32, #tpu.memory_space<smem>>
      memref.store %cst_32, %arg7[%c2_33] : memref<4xf32, #tpu.memory_space<smem>>
      %cst_34 = arith.constant 0.000000e+00 : f32
      %c3_35 = arith.constant 3 : index
      %32 = memref.load %arg7[%c3_35] : memref<4xf32, #tpu.memory_space<smem>>
      memref.store %cst_34, %arg7[%c3_35] : memref<4xf32, #tpu.memory_space<smem>>
    } else {
    }
    %c0 = arith.constant 0 : index
    %c0_2 = arith.constant 0 : index
    %5 = vector.load %arg2[%c0, %c0_2] : memref<32x256xbf16, #tpu.memory_space<vmem>>, vector<32x256xbf16>
    %c0_3 = arith.constant 0 : index
    %c0_4 = arith.constant 0 : index
    %6 = vector.load %arg3[%c0_3, %c0_4] : memref<32x256xbf16, #tpu.memory_space<vmem>>, vector<32x256xbf16>
    %c0_i32_5 = arith.constant 0 : i32
    %7 = arith.cmpi eq, %arg0, %c0_i32_5 : i32
    %8 = arith.extui %7 : i1 to i32
    %c0_i32_6 = arith.constant 0 : i32
    %9 = arith.cmpi ne, %8, %c0_i32_6 : i32
    scf.if %9 {
      %c0_8 = arith.constant 0 : index
      %c0_9 = arith.constant 0 : index
      %13 = vector.load %arg4[%c0_8, %c0_9] : memref<256x128xbf16, #tpu.memory_space<vmem>>, vector<256x128xbf16>
      %cst = arith.constant dense<0.000000e+00> : vector<32x128xf32>
      %14 = tpu.matmul %5, %13, %cst {dimension_numbers = #tpu.dot_dimension_numbers<[1], [0], [0], [1], [0, 0, 1, 1], [], []>} : vector<32x256xbf16>, vector<256x128xbf16>, vector<32x128xf32> -> vector<32x128xf32>
      %c0_10 = arith.constant 0 : index
      %c0_11 = arith.constant 0 : index
      %15 = vector.load %arg4[%c0_10, %c0_11] : memref<256x128xbf16, #tpu.memory_space<vmem>>, vector<256x128xbf16>
      %cst_12 = arith.constant dense<0.000000e+00> : vector<32x128xf32>
      %16 = tpu.matmul %6, %15, %cst_12 {dimension_numbers = #tpu.dot_dimension_numbers<[1], [0], [0], [1], [0, 0, 1, 1], [], []>} : vector<32x256xbf16>, vector<256x128xbf16>, vector<32x128xf32> -> vector<32x128xf32>
      %c0_13 = arith.constant 0 : index
      %c0_14 = arith.constant 0 : index
      %17 = vector.load %arg8[%c0_13, %c0_14] : memref<1x128xf32, #tpu.memory_space<vmem>>, vector<1x128xf32>
      %cst_15 = arith.constant dense<0.000000e+00> : vector<128xf32>
      %18 = vector.multi_reduction <add>, %14, %cst_15 [0] : vector<32x128xf32> to vector<128xf32>
      %19 = vector.shape_cast %18 : vector<128xf32> to vector<1x128xf32>
      %20 = arith.addf %17, %19 : vector<1x128xf32>
      %c0_16 = arith.constant 0 : index
      %c0_17 = arith.constant 0 : index
      %21 = vector.load %arg8[%c0_16, %c0_17] : memref<1x128xf32, #tpu.memory_space<vmem>>, vector<1x128xf32>
      tpu.vector_store %arg8[%c0_16, %c0_17], %20 {strides = array<i32>} : memref<1x128xf32, #tpu.memory_space<vmem>>, vector<1x128xf32>,
      %c0_18 = arith.constant 0 : index
      %c0_19 = arith.constant 0 : index
      %22 = vector.load %arg9[%c0_18, %c0_19] : memref<1x128xf32, #tpu.memory_space<vmem>>, vector<1x128xf32>
      %23 = arith.mulf %14, %14 : vector<32x128xf32>
      %cst_20 = arith.constant dense<0.000000e+00> : vector<128xf32>
      %24 = vector.multi_reduction <add>, %23, %cst_20 [0] : vector<32x128xf32> to vector<128xf32>
      %25 = vector.shape_cast %24 : vector<128xf32> to vector<1x128xf32>
      %26 = arith.addf %22, %25 : vector<1x128xf32>
      %c0_21 = arith.constant 0 : index
      %c0_22 = arith.constant 0 : index
      %27 = vector.load %arg9[%c0_21, %c0_22] : memref<1x128xf32, #tpu.memory_space<vmem>>, vector<1x128xf32>
      tpu.vector_store %arg9[%c0_21, %c0_22], %26 {strides = array<i32>} : memref<1x128xf32, #tpu.memory_space<vmem>>, vector<1x128xf32>,
      %c0_23 = arith.constant 0 : index
      %c0_24 = arith.constant 0 : index
      %28 = vector.load %arg10[%c0_23, %c0_24] : memref<1x128xf32, #tpu.memory_space<vmem>>, vector<1x128xf32>
      %cst_25 = arith.constant dense<0.000000e+00> : vector<128xf32>
      %29 = vector.multi_reduction <add>, %16, %cst_25 [0] : vector<32x128xf32> to vector<128xf32>
      %30 = vector.shape_cast %29 : vector<128xf32> to vector<1x128xf32>
      %31 = arith.addf %28, %30 : vector<1x128xf32>
      %c0_26 = arith.constant 0 : index
      %c0_27 = arith.constant 0 : index
      %32 = vector.load %arg10[%c0_26, %c0_27] : memref<1x128xf32, #tpu.memory_space<vmem>>, vector<1x128xf32>
      tpu.vector_store %arg10[%c0_26, %c0_27], %31 {strides = array<i32>} : memref<1x128xf32, #tpu.memory_space<vmem>>, vector<1x128xf32>,
      %c0_28 = arith.constant 0 : index
      %c0_29 = arith.constant 0 : index
      %33 = vector.load %arg11[%c0_28, %c0_29] : memref<1x128xf32, #tpu.memory_space<vmem>>, vector<1x128xf32>
      %34 = arith.mulf %16, %16 : vector<32x128xf32>
      %cst_30 = arith.constant dense<0.000000e+00> : vector<128xf32>
      %35 = vector.multi_reduction <add>, %34, %cst_30 [0] : vector<32x128xf32> to vector<128xf32>
      %36 = vector.shape_cast %35 : vector<128xf32> to vector<1x128xf32>
      %37 = arith.addf %33, %36 : vector<1x128xf32>
      %c0_31 = arith.constant 0 : index
      %c0_32 = arith.constant 0 : index
      %38 = vector.load %arg11[%c0_31, %c0_32] : memref<1x128xf32, #tpu.memory_space<vmem>>, vector<1x128xf32>
      tpu.vector_store %arg11[%c0_31, %c0_32], %37 {strides = array<i32>} : memref<1x128xf32, #tpu.memory_space<vmem>>, vector<1x128xf32>,
    } else {
    }
    %c1_i32 = arith.constant 1 : i32
    %10 = arith.cmpi eq, %arg0, %c1_i32 : i32
    %11 = arith.extui %10 : i1 to i32
    %c0_i32_7 = arith.constant 0 : i32
    %12 = arith.cmpi ne, %11, %c0_i32_7 : i32
    scf.if %12 {
      %c0_8 = arith.constant 0 : index
      %c0_9 = arith.constant 0 : index
      %13 = vector.load %arg8[%c0_8, %c0_9] : memref<1x128xf32, #tpu.memory_space<vmem>>, vector<1x128xf32>
      %cst = arith.constant 1.562500e-02 : f32
      %14 = vector.broadcast %cst : f32 to vector<1x128xf32>
      %15 = arith.mulf %13, %14 : vector<1x128xf32>
      %c0_10 = arith.constant 0 : index
      %c0_11 = arith.constant 0 : index
      %16 = vector.load %arg10[%c0_10, %c0_11] : memref<1x128xf32, #tpu.memory_space<vmem>>, vector<1x128xf32>
      %cst_12 = arith.constant 1.562500e-02 : f32
      %17 = vector.broadcast %cst_12 : f32 to vector<1x128xf32>
      %18 = arith.mulf %16, %17 : vector<1x128xf32>
      %c0_13 = arith.constant 0 : index
      %c0_14 = arith.constant 0 : index
      %19 = vector.load %arg9[%c0_13, %c0_14] : memref<1x128xf32, #tpu.memory_space<vmem>>, vector<1x128xf32>
      %cst_15 = arith.constant 1.562500e-02 : f32
      %20 = vector.broadcast %cst_15 : f32 to vector<1x128xf32>
      %21 = arith.mulf %19, %20 : vector<1x128xf32>
      %22 = arith.mulf %15, %15 : vector<1x128xf32>
      %23 = arith.subf %21, %22 : vector<1x128xf32>
      %cst_16 = arith.constant 0.000000e+00 : f32
      %24 = vector.broadcast %cst_16 : f32 to vector<1x128xf32>
      %25 = arith.maximumf %23, %24 : vector<1x128xf32>
      %c0_17 = arith.constant 0 : index
      %c0_18 = arith.constant 0 : index
      %26 = vector.load %arg11[%c0_17, %c0_18] : memref<1x128xf32, #tpu.memory_space<vmem>>, vector<1x128xf32>
      %cst_19 = arith.constant 1.562500e-02 : f32
      %27 = vector.broadcast %cst_19 : f32 to vector<1x128xf32>
      %28 = arith.mulf %26, %27 : vector<1x128xf32>
      %29 = arith.mulf %18, %18 : vector<1x128xf32>
      %30 = arith.subf %28, %29 : vector<1x128xf32>
      %cst_20 = arith.constant 0.000000e+00 : f32
      %31 = vector.broadcast %cst_20 : f32 to vector<1x128xf32>
      %32 = arith.maximumf %30, %31 : vector<1x128xf32>
      %cst_21 = arith.constant 9.99999974E-6 : f32
      %33 = vector.broadcast %cst_21 : f32 to vector<1x128xf32>
      %34 = arith.addf %25, %33 : vector<1x128xf32>
      %35 = math.rsqrt %34 : vector<1x128xf32>
      %cst_22 = arith.constant 9.99999974E-6 : f32
      %36 = vector.broadcast %cst_22 : f32 to vector<1x128xf32>
      %37 = arith.addf %32, %36 : vector<1x128xf32>
      %38 = math.rsqrt %37 : vector<1x128xf32>
      %c0_23 = arith.constant 0 : index
      %c0_24 = arith.constant 0 : index
      %39 = vector.load %arg4[%c0_23, %c0_24] : memref<256x128xbf16, #tpu.memory_space<vmem>>, vector<256x128xbf16>
      %cst_25 = arith.constant dense<0.000000e+00> : vector<32x128xf32>
      %40 = tpu.matmul %5, %39, %cst_25 {dimension_numbers = #tpu.dot_dimension_numbers<[1], [0], [0], [1], [0, 0, 1, 1], [], []>} : vector<32x256xbf16>, vector<256x128xbf16>, vector<32x128xf32> -> vector<32x128xf32>
      %c0_26 = arith.constant 0 : index
      %c0_27 = arith.constant 0 : index
      %41 = vector.load %arg4[%c0_26, %c0_27] : memref<256x128xbf16, #tpu.memory_space<vmem>>, vector<256x128xbf16>
      %cst_28 = arith.constant dense<0.000000e+00> : vector<32x128xf32>
      %42 = tpu.matmul %6, %41, %cst_28 {dimension_numbers = #tpu.dot_dimension_numbers<[1], [0], [0], [1], [0, 0, 1, 1], [], []>} : vector<32x256xbf16>, vector<256x128xbf16>, vector<32x128xf32> -> vector<32x128xf32>
      %43 = vector.broadcast %15 : vector<1x128xf32> to vector<32x128xf32>
      %44 = arith.subf %40, %43 : vector<32x128xf32>
      %45 = vector.broadcast %35 : vector<1x128xf32> to vector<32x128xf32>
      %46 = arith.mulf %44, %45 : vector<32x128xf32>
      %cst_29 = arith.constant 0.000000e+00 : f32
      %47 = vector.broadcast %cst_29 : f32 to vector<32x128xf32>
      %48 = arith.maximumf %46, %47 : vector<32x128xf32>
      %49 = arith.truncf %48 : vector<32x128xf32> to vector<32x128xbf16>
      %50 = vector.broadcast %18 : vector<1x128xf32> to vector<32x128xf32>
      %51 = arith.subf %42, %50 : vector<32x128xf32>
      %52 = vector.broadcast %38 : vector<1x128xf32> to vector<32x128xf32>
      %53 = arith.mulf %51, %52 : vector<32x128xf32>
      %cst_30 = arith.constant 0.000000e+00 : f32
      %54 = vector.broadcast %cst_30 : f32 to vector<32x128xf32>
      %55 = arith.maximumf %53, %54 : vector<32x128xf32>
      %56 = arith.truncf %55 : vector<32x128xf32> to vector<32x128xbf16>
      %c0_31 = arith.constant 0 : index
      %c0_32 = arith.constant 0 : index
      %57 = vector.load %arg6[%c0_31, %c0_32] : memref<1x256xf32, #tpu.memory_space<vmem>>, vector<1x256xf32>
      %c0_33 = arith.constant 0 : index
      %c0_34 = arith.constant 0 : index
      %58 = vector.load %arg5[%c0_33, %c0_34] : memref<128x256xbf16, #tpu.memory_space<vmem>>, vector<128x256xbf16>
      %cst_35 = arith.constant dense<0.000000e+00> : vector<32x256xf32>
      %59 = tpu.matmul %49, %58, %cst_35 {dimension_numbers = #tpu.dot_dimension_numbers<[1], [0], [0], [1], [0, 0, 1, 1], [], []>} : vector<32x128xbf16>, vector<128x256xbf16>, vector<32x256xf32> -> vector<32x256xf32>
      %60 = vector.broadcast %57 : vector<1x256xf32> to vector<32x256xf32>
      %61 = arith.addf %59, %60 : vector<32x256xf32>
      %c0_36 = arith.constant 0 : index
      %c0_37 = arith.constant 0 : index
      %62 = vector.load %arg5[%c0_36, %c0_37] : memref<128x256xbf16, #tpu.memory_space<vmem>>, vector<128x256xbf16>
      %cst_38 = arith.constant dense<0.000000e+00> : vector<32x256xf32>
      %63 = tpu.matmul %56, %62, %cst_38 {dimension_numbers = #tpu.dot_dimension_numbers<[1], [0], [0], [1], [0, 0, 1, 1], [], []>} : vector<32x128xbf16>, vector<128x256xbf16>, vector<32x256xf32> -> vector<32x256xf32>
      %64 = vector.broadcast %57 : vector<1x256xf32> to vector<32x256xf32>
      %65 = arith.addf %63, %64 : vector<32x256xf32>
      %c0_39 = arith.constant 0 : index
      %c0_40 = arith.constant 0 : index
      %66 = vector.load %arg2[%c0_39, %c0_40] : memref<32x256xbf16, #tpu.memory_space<vmem>>, vector<32x256xbf16>
      %67 = arith.extf %66 : vector<32x256xbf16> to vector<32x256xf32>
      %c0_41 = arith.constant 0 : index
      %c0_42 = arith.constant 0 : index
      %68 = vector.load %arg3[%c0_41, %c0_42] : memref<32x256xbf16, #tpu.memory_space<vmem>>, vector<32x256xbf16>
      %69 = arith.extf %68 : vector<32x256xbf16> to vector<32x256xf32>
      %70 = arith.mulf %61, %69 : vector<32x256xf32>
      %cst_43 = arith.constant dense<0.000000e+00> : vector<32xf32>
      %71 = vector.multi_reduction <add>, %70, %cst_43 [1] : vector<32x256xf32> to vector<32xf32>
      %72 = vector.shape_cast %71 : vector<32xf32> to vector<32x1xf32>
      %73 = arith.mulf %61, %61 : vector<32x256xf32>
      %cst_44 = arith.constant dense<0.000000e+00> : vector<32xf32>
      %74 = vector.multi_reduction <add>, %73, %cst_44 [1] : vector<32x256xf32> to vector<32xf32>
      %75 = vector.shape_cast %74 : vector<32xf32> to vector<32x1xf32>
      %76 = arith.mulf %69, %69 : vector<32x256xf32>
      %cst_45 = arith.constant dense<0.000000e+00> : vector<32xf32>
      %77 = vector.multi_reduction <add>, %76, %cst_45 [1] : vector<32x256xf32> to vector<32xf32>
      %78 = vector.shape_cast %77 : vector<32xf32> to vector<32x1xf32>
      %79 = arith.mulf %75, %78 : vector<32x1xf32>
      %cst_46 = arith.constant 1.000000e-16 : f32
      %80 = vector.broadcast %cst_46 : f32 to vector<32x1xf32>
      %81 = arith.maximumf %79, %80 : vector<32x1xf32>
      %82 = math.rsqrt %81 : vector<32x1xf32>
      %83 = arith.mulf %72, %82 : vector<32x1xf32>
      %cst_47 = arith.constant 0.000000e+00 : f32
      %84 = vector.broadcast %cst_47 : f32 to vector<32x1xf32>
      %85 = arith.subf %84, %83 : vector<32x1xf32>
      %86 = arith.mulf %65, %67 : vector<32x256xf32>
      %cst_48 = arith.constant dense<0.000000e+00> : vector<32xf32>
      %87 = vector.multi_reduction <add>, %86, %cst_48 [1] : vector<32x256xf32> to vector<32xf32>
      %88 = vector.shape_cast %87 : vector<32xf32> to vector<32x1xf32>
      %89 = arith.mulf %65, %65 : vector<32x256xf32>
      %cst_49 = arith.constant dense<0.000000e+00> : vector<32xf32>
      %90 = vector.multi_reduction <add>, %89, %cst_49 [1] : vector<32x256xf32> to vector<32xf32>
      %91 = vector.shape_cast %90 : vector<32xf32> to vector<32x1xf32>
      %92 = arith.mulf %67, %67 : vector<32x256xf32>
      %cst_50 = arith.constant dense<0.000000e+00> : vector<32xf32>
      %93 = vector.multi_reduction <add>, %92, %cst_50 [1] : vector<32x256xf32> to vector<32xf32>
      %94 = vector.shape_cast %93 : vector<32xf32> to vector<32x1xf32>
      %95 = arith.mulf %91, %94 : vector<32x1xf32>
      %cst_51 = arith.constant 1.000000e-16 : f32
      %96 = vector.broadcast %cst_51 : f32 to vector<32x1xf32>
      %97 = arith.maximumf %95, %96 : vector<32x1xf32>
      %98 = math.rsqrt %97 : vector<32x1xf32>
      %99 = arith.mulf %88, %98 : vector<32x1xf32>
      %cst_52 = arith.constant 0.000000e+00 : f32
      %100 = vector.broadcast %cst_52 : f32 to vector<32x1xf32>
      %101 = arith.subf %100, %99 : vector<32x1xf32>
      %c0_53 = arith.constant 0 : index
      %102 = memref.load %arg12[%c0_53] : memref<8xf32, #tpu.memory_space<smem>>
      %103 = vector.shape_cast %85 : vector<32x1xf32> to vector<1x32x1xf32>
      %cst_54 = arith.constant dense<0.000000e+00> : vector<1xf32>
      %104 = vector.multi_reduction <add>, %103, %cst_54 [1, 2] : vector<1x32x1xf32> to vector<1xf32>
      %105 = vector.shape_cast %104 : vector<1xf32> to vector<1x1x1xf32>
      %106 = vector.extract %105[0, 0, 0] : f32 from vector<1x1x1xf32>
      %107 = arith.addf %102, %106 : f32
      %c0_55 = arith.constant 0 : index
      %108 = memref.load %arg12[%c0_55] : memref<8xf32, #tpu.memory_space<smem>>
      memref.store %107, %arg12[%c0_55] : memref<8xf32, #tpu.memory_space<smem>>
      %c1 = arith.constant 1 : index
      %109 = memref.load %arg12[%c1] : memref<8xf32, #tpu.memory_space<smem>>
      %110 = vector.shape_cast %101 : vector<32x1xf32> to vector<1x32x1xf32>
      %cst_56 = arith.constant dense<0.000000e+00> : vector<1xf32>
      %111 = vector.multi_reduction <add>, %110, %cst_56 [1, 2] : vector<1x32x1xf32> to vector<1xf32>
      %112 = vector.shape_cast %111 : vector<1xf32> to vector<1x1x1xf32>
      %113 = vector.extract %112[0, 0, 0] : f32 from vector<1x1x1xf32>
      %114 = arith.addf %109, %113 : f32
      %c1_57 = arith.constant 1 : index
      %115 = memref.load %arg12[%c1_57] : memref<8xf32, #tpu.memory_space<smem>>
      memref.store %114, %arg12[%c1_57] : memref<8xf32, #tpu.memory_space<smem>>
      %c2 = arith.constant 2 : index
      %116 = memref.load %arg12[%c2] : memref<8xf32, #tpu.memory_space<smem>>
      %117 = arith.mulf %85, %85 : vector<32x1xf32>
      %118 = vector.shape_cast %117 : vector<32x1xf32> to vector<1x32x1xf32>
      %cst_58 = arith.constant dense<0.000000e+00> : vector<1xf32>
      %119 = vector.multi_reduction <add>, %118, %cst_58 [1, 2] : vector<1x32x1xf32> to vector<1xf32>
      %120 = vector.shape_cast %119 : vector<1xf32> to vector<1x1x1xf32>
      %121 = vector.extract %120[0, 0, 0] : f32 from vector<1x1x1xf32>
      %122 = arith.addf %116, %121 : f32
      %c2_59 = arith.constant 2 : index
      %123 = memref.load %arg12[%c2_59] : memref<8xf32, #tpu.memory_space<smem>>
      memref.store %122, %arg12[%c2_59] : memref<8xf32, #tpu.memory_space<smem>>
      %cst_60 = arith.constant dense<0.000000e+00> : vector<32xf32>
      %124 = vector.multi_reduction <add>, %67, %cst_60 [1] : vector<32x256xf32> to vector<32xf32>
      %125 = vector.shape_cast %124 : vector<32xf32> to vector<32x1xf32>
      %cst_61 = arith.constant 2.560000e+02 : f32
      %126 = vector.broadcast %cst_61 : f32 to vector<32x1xf32>
      %127 = arith.divf %125, %126 : vector<32x1xf32>
      %128 = vector.broadcast %127 : vector<32x1xf32> to vector<32x256xf32>
      %129 = arith.subf %67, %128 : vector<32x256xf32>
      %130 = arith.mulf %129, %129 : vector<32x256xf32>
      %cst_62 = arith.constant dense<0.000000e+00> : vector<32xf32>
      %131 = vector.multi_reduction <add>, %130, %cst_62 [1] : vector<32x256xf32> to vector<32xf32>
      %132 = vector.shape_cast %131 : vector<32xf32> to vector<32x1xf32>
      %cst_63 = arith.constant 0.00392156886 : f32
      %133 = vector.broadcast %cst_63 : f32 to vector<32x1xf32>
      %134 = arith.mulf %132, %133 : vector<32x1xf32>
      %c3 = arith.constant 3 : index
      %135 = memref.load %arg12[%c3] : memref<8xf32, #tpu.memory_space<smem>>
      %136 = math.sqrt %134 : vector<32x1xf32>
      %137 = vector.shape_cast %136 : vector<32x1xf32> to vector<1x32x1xf32>
      %cst_64 = arith.constant dense<0.000000e+00> : vector<1xf32>
      %138 = vector.multi_reduction <add>, %137, %cst_64 [1, 2] : vector<1x32x1xf32> to vector<1xf32>
      %139 = vector.shape_cast %138 : vector<1xf32> to vector<1x1x1xf32>
      %140 = vector.extract %139[0, 0, 0] : f32 from vector<1x1x1xf32>
      %141 = arith.addf %135, %140 : f32
      %c3_65 = arith.constant 3 : index
      %142 = memref.load %arg12[%c3_65] : memref<8xf32, #tpu.memory_space<smem>>
      memref.store %141, %arg12[%c3_65] : memref<8xf32, #tpu.memory_space<smem>>
      %c4 = arith.constant 4 : index
      %143 = memref.load %arg12[%c4] : memref<8xf32, #tpu.memory_space<smem>>
      %144 = vector.shape_cast %127 : vector<32x1xf32> to vector<1x32x1xf32>
      %cst_66 = arith.constant dense<0.000000e+00> : vector<1xf32>
      %145 = vector.multi_reduction <add>, %144, %cst_66 [1, 2] : vector<1x32x1xf32> to vector<1xf32>
      %146 = vector.shape_cast %145 : vector<1xf32> to vector<1x1x1xf32>
      %147 = vector.extract %146[0, 0, 0] : f32 from vector<1x1x1xf32>
      %148 = arith.addf %143, %147 : f32
      %c4_67 = arith.constant 4 : index
      %149 = memref.load %arg12[%c4_67] : memref<8xf32, #tpu.memory_space<smem>>
      memref.store %148, %arg12[%c4_67] : memref<8xf32, #tpu.memory_space<smem>>
      %c1_i32_68 = arith.constant 1 : i32
      %150 = arith.cmpi eq, %arg1, %c1_i32_68 : i32
      %151 = arith.extui %150 : i1 to i32
      %c0_i32_69 = arith.constant 0 : i32
      %152 = arith.cmpi ne, %151, %c0_i32_69 : i32
      scf.if %152 {
        %c0_70 = arith.constant 0 : index
        %153 = memref.load %arg12[%c0_70] : memref<8xf32, #tpu.memory_space<smem>>
        %c1_71 = arith.constant 1 : index
        %154 = memref.load %arg12[%c1_71] : memref<8xf32, #tpu.memory_space<smem>>
        %c2_72 = arith.constant 2 : index
        %155 = memref.load %arg12[%c2_72] : memref<8xf32, #tpu.memory_space<smem>>
        %cst_73 = arith.constant 1.562500e-02 : f32
        %156 = arith.mulf %153, %cst_73 : f32
        %cst_74 = arith.constant 5.000000e-01 : f32
        %157 = arith.mulf %cst_74, %156 : f32
        %cst_75 = arith.constant 1.562500e-02 : f32
        %158 = arith.mulf %154, %cst_75 : f32
        %cst_76 = arith.constant 5.000000e-01 : f32
        %159 = arith.mulf %cst_76, %158 : f32
        %160 = arith.addf %157, %159 : f32
        %161 = arith.mulf %153, %156 : f32
        %162 = arith.subf %155, %161 : f32
        %cst_77 = arith.constant 0.000000e+00 : f32
        %163 = arith.maximumf %162, %cst_77 : f32
        %cst_78 = arith.constant 0.0158730168 : f32
        %164 = arith.mulf %163, %cst_78 : f32
        %c0_79 = arith.constant 0 : index
        %165 = memref.load %arg7[%c0_79] : memref<4xf32, #tpu.memory_space<smem>>
        memref.store %160, %arg7[%c0_79] : memref<4xf32, #tpu.memory_space<smem>>
        %c1_80 = arith.constant 1 : index
        %166 = memref.load %arg7[%c1_80] : memref<4xf32, #tpu.memory_space<smem>>
        memref.store %164, %arg7[%c1_80] : memref<4xf32, #tpu.memory_space<smem>>
        %c3_81 = arith.constant 3 : index
        %167 = memref.load %arg12[%c3_81] : memref<8xf32, #tpu.memory_space<smem>>
        %cst_82 = arith.constant 1.562500e-02 : f32
        %168 = arith.mulf %167, %cst_82 : f32
        %c2_83 = arith.constant 2 : index
        %169 = memref.load %arg7[%c2_83] : memref<4xf32, #tpu.memory_space<smem>>
        memref.store %168, %arg7[%c2_83] : memref<4xf32, #tpu.memory_space<smem>>
        %c4_84 = arith.constant 4 : index
        %170 = memref.load %arg12[%c4_84] : memref<8xf32, #tpu.memory_space<smem>>
        %cst_85 = arith.constant 1.562500e-02 : f32
        %171 = arith.mulf %170, %cst_85 : f32
        %c3_86 = arith.constant 3 : index
        %172 = memref.load %arg7[%c3_86] : memref<4xf32, #tpu.memory_space<smem>>
        memref.store %171, %arg7[%c3_86] : memref<4xf32, #tpu.memory_space<smem>>
      } else {
      }
    } else {
    }
    return
  }
  func.func @transform_0(%arg0: i32, %arg1: i32) -> (i32, i32) {
    %c0_i32 = arith.constant 0 : i32
    %c0_i32_0 = arith.constant 0 : i32
    return %arg1, %c0_i32 : i32, i32
  }
  func.func @transform_1(%arg0: i32, %arg1: i32) -> (i32, i32) {
    %c0_i32 = arith.constant 0 : i32
    %c0_i32_0 = arith.constant 0 : i32
    return %arg1, %c0_i32 : i32, i32
  }
  func.func @transform_2(%arg0: i32, %arg1: i32) -> (i32, i32) {
    %c0_i32 = arith.constant 0 : i32
    %c0_i32_0 = arith.constant 0 : i32
    %c0_i32_1 = arith.constant 0 : i32
    return %c0_i32, %c0_i32_0 : i32, i32
  }
  func.func @transform_3(%arg0: i32, %arg1: i32) -> (i32, i32) {
    %c0_i32 = arith.constant 0 : i32
    %c0_i32_0 = arith.constant 0 : i32
    %c0_i32_1 = arith.constant 0 : i32
    return %c0_i32, %c0_i32_0 : i32, i32
  }
  func.func @transform_4(%arg0: i32, %arg1: i32) -> (i32, i32) {
    %c0_i32 = arith.constant 0 : i32
    %c0_i32_0 = arith.constant 0 : i32
    %c0_i32_1 = arith.constant 0 : i32
    return %c0_i32, %c0_i32_0 : i32, i32
  }
  func.func @transform_5(%arg0: i32, %arg1: i32) -> i32 {
    %c0_i32 = arith.constant 0 : i32
    %c0_i32_0 = arith.constant 0 : i32
    return %c0_i32 : i32
  }
}

</mosaic_0001>

<llo_original>
// kernel: tpu_custom_call.1
$region0: #{tpu_custom_call.1}
  #allocation0 [shape = 'u32[]', space=smem, size = 0x4, offset = 0x4, fixed_abs, tag = 'smem constant byte address 0x4 - core index']
  #allocation1 [shape = 'u32[144,128]{1,0:T(1,128)}', space=vmem, size = 0x12000, scoped, tag = 'internal scratch']
  #allocation2 [shape = 'f32[1,128]{1,0:T(1,128)}', space=vmem, size = 0x200, scoped, tag = 'scratch operand']
  #allocation3 [shape = 'f32[1,128]{1,0:T(1,128)}', space=vmem, size = 0x200, scoped, tag = 'scratch operand']
  #allocation4 [shape = 'f32[1,128]{1,0:T(1,128)}', space=vmem, size = 0x200, scoped, tag = 'scratch operand']
  #allocation5 [shape = 'f32[1,128]{1,0:T(1,128)}', space=vmem, size = 0x200, scoped, tag = 'scratch operand']
  #allocation6 [shape = 'f32[8]{0:T(128)}', space=smem, size = 0x200, scoped, tag = 'scratch operand']
  %s0 = inlined_call_operand.hbm [shape: bf16[64,256], index: 0, kind: input, shape index: {}]
  %s1 = inlined_call_operand.hbm [shape: bf16[64,256], index: 1, kind: input, shape index: {}]
  %s2 = inlined_call_operand.hbm [shape: bf16[256,128], index: 2, kind: input, shape index: {}]
  %s3 = inlined_call_operand.hbm [shape: bf16[128,256], index: 3, kind: input, shape index: {}]
  %s4 = inlined_call_operand.vmem [shape: f32[1,256], index: 4, kind: input, shape index: {}]
  %s5 = inlined_call_operand.hbm [shape: f32[4], index: 5, kind: output, shape index: {}]
  %s6 = sld [smem:[#allocation0]]
  $region85: #{tpu_custom_call.1} parent=0
    _
  %s8 = ssub.s32 1, %s6
  %s9 = scalar_select 0, %s8, %s6
  $region1: #{tpu_custom_call.1} parent=0
    #allocation7 [shape = 'u8[32768]{0}', space=vmem, size = 0x8000, scoped, tag = 'input window, operand 0']
    #allocation8 [shape = 's32[2]{0}', space=sflag, size = 0x8, scoped, tag = 'scoped memory for tpu_custom_call.1']
    #allocation9 [shape = 's32[2]{0}', space=sflag, size = 0x8, scoped, tag = 'scoped memory for tpu_custom_call.1']
    #allocation10 [shape = 'u8[32768]{0}', space=vmem, size = 0x8000, scoped, tag = 'input window, operand 1']
    #allocation11 [shape = 's32[2]{0}', space=sflag, size = 0x8, scoped, tag = 'scoped memory for tpu_custom_call.1']
    #allocation12 [shape = 'u8[65536]{0}', space=vmem, size = 0x10000, scoped, tag = 'input window, operand 2, single buffered']
    #allocation13 [shape = 'u8[65536]{0}', space=vmem, size = 0x10000, scoped, tag = 'input window, operand 3, single buffered']
    #allocation14 [shape = 's32[1]{0}', space=sflag, size = 0x4, scoped, tag = 'scoped memory for tpu_custom_call.1']
    #allocation15 [shape = 'u8[512]{0}', space=smem, size = 0x200, scoped, tag = 'output window, operand 0, single buffered']
    %10 = vsyncpa [#allocation8], 0
    %s11 = scalar_lea.sflag [#allocation8], 1
    %12 = vsyncpa %s11, 0
    %13 = vsyncpa [#allocation11], 0
    %s14 = scalar_lea.sflag [#allocation11], 1
    %15 = vsyncpa %s14, 0
    %16 = vsyncpa [#allocation14], 0
    %17 = vsyncpa [#allocation9], 0
    loop: start=0, step=1, limit=6
    $region2: #{tpu_custom_call.1} parent=1 // loop_pre_header
      _
    $region3: #{tpu_custom_call.1} parent=1 // loop_header
      %s19 = sphi 0, %s23
      %p20 = scmp.ge.s32.totalorder %s19, 6
      %s26 = sphi 0, %s38
      %s27 = sphi 0, %s34
      %s28 = sphi 0, %s26
      %s29 = sphi 0, %s27
      %s30 = sphi 0, %s28
      %s31 = sphi 0, %s29
      %s41 = sphi 0, %s43
      %s44 = sphi 0, %s41
      %s45 = sphi 0, %s44
      %s61 = sphi 0, %s45
      %s67 = sphi 0, %s69
      %s70 = sphi 0, %s67
      %s71 = sphi 0, %s70
      %s87 = sphi 0, %s71
      %s91 = sphi 0, %s91
      %s93 = sphi 0, %s91
      %s94 = sphi 0, %s93
      %s108 = sphi 0, %s94
      %s112 = sphi 0, %s112
      %s114 = sphi 0, %s112
      %s115 = sphi 0, %s114
      %s129 = sphi 0, %s115
      %s133 = sphi 0, %s133
      %s135 = sphi 0, %s133
      %s136 = sphi 0, %s135
      %s150 = sphi 0, %s136
      %s154 = sphi 0, %s154
      %s156 = sphi 0, %s154
      %s157 = sphi 0, %s156
      %s171 = sphi 0, %s157
    $region4: #{tpu_custom_call.1} parent=1 // loop_header_branch
      %22 = sbr.rel (%p20) target = $region8
    $region5: #{tpu_custom_call.1} parent=1 // loop_body
      %s24 = ssub.s32 %s19, 1
      %s25 = ssub.s32 %s19, 2
      %s32 = sadd.s32 1, %s27
      %p33 = scmp.ge.s32.totalorder %s32, 2
      %s34 = scalar_select %p33, 0, %s32
      %s35 = sadd.s32 1, %s26
      %s36 = scalar_select %p33, %s35, %s26
      %p37 = scmp.ge.s32.totalorder %s36, 2
      %s38 = scalar_select %p37, 0, %s36
      %s39 = ssub.s32 %s27, %s34
      %p40 = scmp.eq.s32.totalorder %s39, 0
      %s42 = sadd.s32 %s41, 1
      %s43 = scalar_select %p40, %s41, %s42
      %p46 = pneg %p40
      %p47 = scmp.eq.s32.totalorder %s19, 3
      %p48 = por %p46, %p47
      %p49 = scmp.ne.s32.totalorder %s41, %s44
      %p50 = scmp.eq.s32.totalorder %s19, 0
      %p51 = por %p49, %p50
      %p52 = scmp.ne.s32.totalorder %s41, %s44
      %p53 = scmp.eq.s32.totalorder %s24, 3
      %p54 = por %p52, %p53
      %p55 = scmp.ne.s32.totalorder %s44, %s45
      %p56 = scmp.eq.s32.totalorder %s24, 0
      %p57 = por %p55, %p56
      %p58 = scmp.ne.s32.totalorder %s44, %s45
      %p59 = scmp.eq.s32.totalorder %s25, 3
      %p60 = por %p58, %p59
      %p62 = scmp.ne.s32.totalorder %s45, %s61
      %p63 = scmp.eq.s32.totalorder %s25, 0
      %p64 = por %p62, %p63
      %s65 = ssub.s32 %s27, %s34
      %p66 = scmp.eq.s32.totalorder %s65, 0
      %s68 = sadd.s32 %s67, 1
      %s69 = scalar_select %p66, %s67, %s68
      %p72 = pneg %p66
      %p73 = scmp.eq.s32.totalorder %s19, 3
      %p74 = por %p72, %p73
      %p75 = scmp.ne.s32.totalorder %s67, %s70
      %p76 = scmp.eq.s32.totalorder %s19, 0
      %p77 = por %p75, %p76
      %p78 = scmp.ne.s32.totalorder %s67, %s70
      %p79 = scmp.eq.s32.totalorder %s24, 3
      %p80 = por %p78, %p79
      %p81 = scmp.ne.s32.totalorder %s70, %s71
      %p82 = scmp.eq.s32.totalorder %s24, 0
      %p83 = por %p81, %p82
      %p84 = scmp.ne.s32.totalorder %s70, %s71
      %p85 = scmp.eq.s32.totalorder %s25, 3
      %p86 = por %p84, %p85
      %p88 = scmp.ne.s32.totalorder %s71, %s87
      %p89 = scmp.eq.s32.totalorder %s25, 0
      %p90 = por %p88, %p89
      %s92 = sadd.s32 %s91, 1
      %p95 = scmp.eq.s32.totalorder %s19, 3
      %p96 = scmp.ne.s32.totalorder %s91, %s93
      %p97 = scmp.eq.s32.totalorder %s19, 0
      %p98 = por %p96, %p97
      %p99 = scmp.ne.s32.totalorder %s91, %s93
      %p100 = scmp.eq.s32.totalorder %s24, 3
      %p101 = por %p99, %p100
      %p102 = scmp.ne.s32.totalorder %s93, %s94
      %p103 = scmp.eq.s32.totalorder %s24, 0
      %p104 = por %p102, %p103
      %p105 = scmp.ne.s32.totalorder %s93, %s94
      %p106 = scmp.eq.s32.totalorder %s25, 3
      %p107 = por %p105, %p106
      %p109 = scmp.ne.s32.totalorder %s94, %s108
      %p110 = scmp.eq.s32.totalorder %s25, 0
      %p111 = por %p109, %p110
      %s113 = sadd.s32 %s112, 1
      %p116 = scmp.eq.s32.totalorder %s19, 3
      %p117 = scmp.ne.s32.totalorder %s112, %s114
      %p118 = scmp.eq.s32.totalorder %s19, 0
      %p119 = por %p117, %p118
      %p120 = scmp.ne.s32.totalorder %s112, %s114
      %p121 = scmp.eq.s32.totalorder %s24, 3
      %p122 = por %p120, %p121
      %p123 = scmp.ne.s32.totalorder %s114, %s115
      %p124 = scmp.eq.s32.totalorder %s24, 0
      %p125 = por %p123, %p124
      %p126 = scmp.ne.s32.totalorder %s114, %s115
      %p127 = scmp.eq.s32.totalorder %s25, 3
      %p128 = por %p126, %p127
      %p130 = scmp.ne.s32.totalorder %s115, %s129
      %p131 = scmp.eq.s32.totalorder %s25, 0
      %p132 = por %p130, %p131
      %s134 = sadd.s32 %s133, 1
      %p137 = scmp.eq.s32.totalorder %s19, 3
      %p138 = scmp.ne.s32.totalorder %s133, %s135
      %p139 = scmp.eq.s32.totalorder %s19, 0
      %p140 = por %p138, %p139
      %p141 = scmp.ne.s32.totalorder %s133, %s135
      %p142 = scmp.eq.s32.totalorder %s24, 3
      %p143 = por %p141, %p142
      %p144 = scmp.ne.s32.totalorder %s135, %s136
      %p145 = scmp.eq.s32.totalorder %s24, 0
      %p146 = por %p144, %p145
      %p147 = scmp.ne.s32.totalorder %s135, %s136
      %p148 = scmp.eq.s32.totalorder %s25, 3
      %p149 = por %p147, %p148
      %p151 = scmp.ne.s32.totalorder %s136, %s150
      %p152 = scmp.eq.s32.totalorder %s25, 0
      %p153 = por %p151, %p152
      %s155 = sadd.s32 %s154, 1
      %p158 = scmp.eq.s32.totalorder %s19, 3
      %p159 = scmp.ne.s32.totalorder %s154, %s156
      %p160 = scmp.eq.s32.totalorder %s19, 0
      %p161 = por %p159, %p160
      %p162 = scmp.ne.s32.totalorder %s154, %s156
      %p163 = scmp.eq.s32.totalorder %s24, 3
      %p164 = por %p162, %p163
      %p165 = scmp.ne.s32.totalorder %s156, %s157
      %p166 = scmp.eq.s32.totalorder %s24, 0
      %p167 = por %p165, %p166
      %p168 = scmp.ne.s32.totalorder %s156, %s157
      %p169 = scmp.eq.s32.totalorder %s25, 3
      %p170 = por %p168, %p169
      %p172 = scmp.ne.s32.totalorder %s157, %s171
      %p173 = scmp.eq.s32.totalorder %s25, 0
      %p174 = por %p172, %p173
      %p175 = scmp.le.s32.totalorder 1, %s19
      %p176 = scmp.lt.s32.totalorder %s19, 5
      %p177 = pnand %p175, %p176
      %p178 = pneg %p177
      // Predicated region
      $region9: #{tpu_custom_call.1} parent=5 // pred_check
        _
      $region10: #{tpu_custom_call.1} parent=5 // pred_check_branch
        %180 = sbr.rel (%p177) target = $region12
      $region11: #{tpu_custom_call.1} parent=5 // pred_region
        %s181 = ssub.s32 %s19, 1
        // Predicated region
        $region13: #{tpu_custom_call.1} parent=11 // pred_check
          %p182 = pneg %p104
        $region14: #{tpu_custom_call.1} parent=11 // pred_check_branch
          %184 = sbr.rel (%p182) target = $region16
        $region15: #{tpu_custom_call.1} parent=11 // pred_region
          %s186 = ssub.s32 2048, 2048
          %187 = vsyncadd [#allocation11], %s186
          %s188 = sshll.u32 [#allocation12], 4
          %s189 = int_to_ptr.vmem [resolvable:$true] %s188
          %194 = dma.hbm_to_vmem [thread:$0]  %s2, 2048, %s189, [#allocation11], 64, 64, 4
        $region16: #{tpu_custom_call.1} parent=11 // pred_fallthru
          _
        // Predicated region
        $region17: #{tpu_custom_call.1} parent=11 // pred_check
          %p195 = pneg %p125
        $region18: #{tpu_custom_call.1} parent=11 // pred_check_branch
          %197 = sbr.rel (%p195) target = $region20
        $region19: #{tpu_custom_call.1} parent=11 // pred_region
          %s199 = ssub.s32 2048, 2048
          %200 = vsyncadd [#allocation14], %s199
          %s201 = sshll.u32 [#allocation13], 4
          %s202 = int_to_ptr.vmem [resolvable:$true] %s201
          %207 = dma.hbm_to_vmem [thread:$0]  %s3, 2048, %s202, [#allocation14], 128, 128, 8
        $region20: #{tpu_custom_call.1} parent=11 // pred_fallthru
          _
        // Predicated region
        $region21: #{tpu_custom_call.1} parent=11 // pred_check
          %p208 = pneg %p146
        $region22: #{tpu_custom_call.1} parent=11 // pred_check_branch
          %210 = sbr.rel (%p208) target = $region24
        $region23: #{tpu_custom_call.1} parent=11 // pred_region
          _
        $region24: #{tpu_custom_call.1} parent=11 // pred_fallthru
          _
      $region12: #{tpu_custom_call.1} parent=5 // pred_fallthru
        _
      %p211 = scmp.lt.s32.totalorder %s19, 4
      // Predicated region
      $region25: #{tpu_custom_call.1} parent=5 // pred_check
        %p212 = pneg %p211
      $region26: #{tpu_custom_call.1} parent=5 // pred_check_branch
        %214 = sbr.rel (%p212) target = $region28
      $region27: #{tpu_custom_call.1} parent=5 // pred_region
        // Predicated region
        $region29: #{tpu_custom_call.1} parent=27 // pred_check
          %p215 = pneg %p51
        $region30: #{tpu_custom_call.1} parent=27 // pred_check_branch
          %217 = sbr.rel (%p215) target = $region32
        $region31: #{tpu_custom_call.1} parent=27 // pred_region
          %s218 = sand.u32 %s41, 1
          %s219 = scalar_lea.sflag [#allocation8], %s218
          %s220 = sand.u32 %s41, 1
          %s221 = smul.addr %s220, 32
          %s222 = scalar_lea.vmem [#allocation7], %s221
          %s223 = smul.u32 4, %s27
          %s225 = ssub.s32 512, 512
          %226 = vsyncadd %s219, %s225
          %s227 = smul.addr %s223, 2
          %s228 = smul.addr %s227, 64
          %s229 = scalar_lea.hbm %s0, %s228
          %s230 = sshll.u32 %s222, 4
          %s231 = int_to_ptr.vmem [resolvable:$true] %s230
          %236 = dma.hbm_to_vmem [thread:$0]  %s229, 512, %s231, %s219, 128, 128, 8
        $region32: #{tpu_custom_call.1} parent=27 // pred_fallthru
          _
        // Predicated region
        $region33: #{tpu_custom_call.1} parent=27 // pred_check
          %p237 = pneg %p77
        $region34: #{tpu_custom_call.1} parent=27 // pred_check_branch
          %239 = sbr.rel (%p237) target = $region36
        $region35: #{tpu_custom_call.1} parent=27 // pred_region
          %s240 = sand.u32 %s19, 1
          %s241 = scalar_lea.sflag [#allocation11], %s240
          %s242 = sand.u32 %s67, 1
          %s243 = smul.addr %s242, 32
          %s244 = scalar_lea.vmem [#allocation10], %s243
          %s245 = smul.u32 4, %s27
          %s247 = ssub.s32 512, 512
          %248 = vsyncadd %s241, %s247
          %s249 = smul.addr %s245, 2
          %s250 = smul.addr %s249, 64
          %s251 = scalar_lea.hbm %s1, %s250
          %s252 = sshll.u32 %s244, 4
          %s253 = int_to_ptr.vmem [resolvable:$true] %s252
          %258 = dma.hbm_to_vmem [thread:$0]  %s251, 512, %s253, %s241, 128, 128, 8
        $region36: #{tpu_custom_call.1} parent=27 // pred_fallthru
          _
      $region28: #{tpu_custom_call.1} parent=5 // pred_fallthru
        _
      %p259 = scmp.le.s32.totalorder 1, %s19
      %p260 = scmp.lt.s32.totalorder %s19, 5
      %p261 = pnand %p259, %p260
      %p262 = pneg %p261
      // Predicated region
      $region37: #{tpu_custom_call.1} parent=5 // pred_check
        _
      $region38: #{tpu_custom_call.1} parent=5 // pred_check_branch
        %264 = sbr.rel (%p261) target = $region40
      $region39: #{tpu_custom_call.1} parent=5 // pred_region
        %s265 = ssub.s32 %s19, 1
        %s266 = sand.u32 %s44, 1
        %s267 = scalar_lea.sflag [#allocation8], %s266
        %s268 = sand.u32 %s44, 1
        %s269 = smul.addr %s268, 32
        %s270 = scalar_lea.vmem [#allocation7], %s269
        // Predicated region
        $region41: #{tpu_custom_call.1} parent=39 // pred_check
          %p271 = pneg %p57
        $region42: #{tpu_custom_call.1} parent=39 // pred_check_branch
          %273 = sbr.rel (%p271) target = $region44
        $region43: #{tpu_custom_call.1} parent=39 // pred_region
          %274 = dma.done %s267, 512
        $region44: #{tpu_custom_call.1} parent=39 // pred_fallthru
          _
        %s275 = sand.u32 %s24, 1
        %s276 = scalar_lea.sflag [#allocation11], %s275
        %s277 = sand.u32 %s70, 1
        %s278 = smul.addr %s277, 32
        %s279 = scalar_lea.vmem [#allocation10], %s278
        // Predicated region
        $region45: #{tpu_custom_call.1} parent=39 // pred_check
          %p280 = pneg %p83
        $region46: #{tpu_custom_call.1} parent=39 // pred_check_branch
          %282 = sbr.rel (%p280) target = $region48
        $region47: #{tpu_custom_call.1} parent=39 // pred_region
          %283 = dma.done %s276, 512
        $region48: #{tpu_custom_call.1} parent=39 // pred_fallthru
          _
        // Predicated region
        $region49: #{tpu_custom_call.1} parent=39 // pred_check
          %p284 = pneg %p104
        $region50: #{tpu_custom_call.1} parent=39 // pred_check_branch
          %286 = sbr.rel (%p284) target = $region52
        $region51: #{tpu_custom_call.1} parent=39 // pred_region
          %287 = dma.done [#allocation11], 2048
        $region52: #{tpu_custom_call.1} parent=39 // pred_fallthru
          _
        // Predicated region
        $region53: #{tpu_custom_call.1} parent=39 // pred_check
          %p288 = pneg %p125
        $region54: #{tpu_custom_call.1} parent=39 // pred_check_branch
          %290 = sbr.rel (%p288) target = $region56
        $region55: #{tpu_custom_call.1} parent=39 // pred_region
          %291 = dma.done [#allocation14], 2048
        $region56: #{tpu_custom_call.1} parent=39 // pred_fallthru
          _
        %s292 = sand.u32 %s44, 1
        %s293 = scalar_lea.sflag [#allocation8], %s292
        %s294 = sand.u32 %s44, 1
        %s295 = smul.addr %s294, 32
        %s296 = scalar_lea.vmem [#allocation7], %s295
        %p297 = pneg %p57
        %p298 = pneg %p54
        %s299 = sand.u32 %s24, 1
        %s300 = scalar_lea.sflag [#allocation11], %s299
        %s301 = sand.u32 %s70, 1
        %s302 = smul.addr %s301, 32
        %s303 = scalar_lea.vmem [#allocation10], %s302
        %p304 = pneg %p83
        %p305 = pneg %p80
        %p306 = pneg %p104
        %p307 = pneg %p101
        %p308 = pneg %p125
        %p309 = pneg %p122
        %p310 = pneg %p146
        %p311 = pneg %p143
        %p312 = pneg %p167
        %p313 = pneg %p164
        %s314 = smul.u32 4, %s29
        %s315 = smul.u32 4, %s29
        %p317 = scmp.eq.s32.totalorder %s28, 0
        %p318 = scmp.eq.s32.totalorder %s29, 0
        %p319 = pnand %p317, %p318
        %p320 = pneg %p319
        // Predicated region
        $region57: #{tpu_custom_call.1} parent=39 // pred_check
          _
        $region58: #{tpu_custom_call.1} parent=39 // pred_check_branch
          %322 = sbr.rel (%p319) target = $region60
        $region59: #{tpu_custom_call.1} parent=39 // pred_region
          %323 = vst [vmem:[#allocation2] sm:$0x1] 0.0
          %324 = vst [vmem:[#allocation3] sm:$0x1] 0.0
          %325 = vst [vmem:[#allocation4] sm:$0x1] 0.0
          %326 = vst [vmem:[#allocation5] sm:$0x1] 0.0
          %s327 = scalar_lea.smem [#allocation6], 0
          %328 = sst [smem:[%s327]] 0.0
          %s329 = scalar_lea.smem [#allocation6], 1
          %330 = sst [smem:[%s329]] 0.0
          %s331 = scalar_lea.smem [#allocation6], 2
          %332 = sst [smem:[%s331]] 0.0
          %s333 = scalar_lea.smem [#allocation6], 3
          %334 = sst [smem:[%s333]] 0.0
          %s335 = scalar_lea.smem [#allocation6], 4
          %336 = sst [smem:[%s335]] 0.0
          %s337 = scalar_lea.smem [#allocation6], 5
          %338 = sst [smem:[%s337]] 0.0
          %s339 = scalar_lea.smem [#allocation6], 6
          %340 = sst [smem:[%s339]] 0.0
          %s341 = scalar_lea.smem [#allocation6], 7
          %342 = sst [smem:[%s341]] 0.0
          %s343 = scalar_lea.smem [#allocation15], 0
          %344 = sst [smem:[%s343]] 0.0
          %s345 = scalar_lea.smem [#allocation15], 1
          %346 = sst [smem:[%s345]] 0.0
          %s347 = scalar_lea.smem [#allocation15], 2
          %348 = sst [smem:[%s347]] 0.0
          %s349 = scalar_lea.smem [#allocation15], 3
          %350 = sst [smem:[%s349]] 0.0
        $region60: #{tpu_custom_call.1} parent=39 // pred_fallthru
          _
        %v351 = vld [vmem:[%s270] sm:$0xff]
        %v352 = vld [vmem:[%s270 + $0x8] sm:$0xff]
        %v353 = vld [vmem:[%s270 + $0x10] sm:$0xff]
        %v354 = vld [vmem:[%s270 + $0x18] sm:$0xff]
        %v355 = vld [vmem:[%s279] sm:$0xff]
        %v356 = vld [vmem:[%s279 + $0x8] sm:$0xff]
        %v357 = vld [vmem:[%s279 + $0x10] sm:$0xff]
        %v358 = vld [vmem:[%s279 + $0x18] sm:$0xff]
        // Predicated region
        $region61: #{tpu_custom_call.1} parent=39 // pred_check
          %p359 = pneg %p317
        $region62: #{tpu_custom_call.1} parent=39 // pred_check_branch
          %361 = sbr.rel (%p359) target = $region64
        $region63: #{tpu_custom_call.1} parent=39 // pred_region
          %v362 = vld [vmem:[#allocation12] sm:$0xf]
          %v363 = vld [vmem:[#allocation12 + $0x4] sm:$0xf]
          %v364 = vld [vmem:[#allocation12 + $0x8] sm:$0xf]
          %v365 = vld [vmem:[#allocation12 + $0xc] sm:$0xf]
          %v366 = vld [vmem:[#allocation12 + $0x10] sm:$0xf]
          %v367 = vld [vmem:[#allocation12 + $0x14] sm:$0xf]
          %v368 = vld [vmem:[#allocation12 + $0x18] sm:$0xf]
          %v369 = vld [vmem:[#allocation12 + $0x1c] sm:$0xf]
          %v370 = vld [vmem:[#allocation12 + $0x20] sm:$0xf]
          %v371 = vld [vmem:[#allocation12 + $0x24] sm:$0xf]
          %v372 = vld [vmem:[#allocation12 + $0x28] sm:$0xf]
          %v373 = vld [vmem:[#allocation12 + $0x2c] sm:$0xf]
          %v374 = vld [vmem:[#allocation12 + $0x30] sm:$0xf]
          %v375 = vld [vmem:[#allocation12 + $0x34] sm:$0xf]
          %v376 = vld [vmem:[#allocation12 + $0x38] sm:$0xf]
          %v377 = vld [vmem:[#allocation12 + $0x3c] sm:$0xf]
          %v378 = vld [vmem:[#allocation12 + $0x40] sm:$0xf]
          %v379 = vld [vmem:[#allocation12 + $0x44] sm:$0xf]
          %v380 = vld [vmem:[#allocation12 + $0x48] sm:$0xf]
          %v381 = vld [vmem:[#allocation12 + $0x4c] sm:$0xf]
          %v382 = vld [vmem:[#allocation12 + $0x50] sm:$0xf]
          %v383 = vld [vmem:[#allocation12 + $0x54] sm:$0xf]
          %v384 = vld [vmem:[#allocation12 + $0x58] sm:$0xf]
          %v385 = vld [vmem:[#allocation12 + $0x5c] sm:$0xf]
          %v386 = vld [vmem:[#allocation12 + $0x60] sm:$0xf]
          %v387 = vld [vmem:[#allocation12 + $0x64] sm:$0xf]
          %v388 = vld [vmem:[#allocation12 + $0x68] sm:$0xf]
          %v389 = vld [vmem:[#allocation12 + $0x6c] sm:$0xf]
          %v390 = vld [vmem:[#allocation12 + $0x70] sm:$0xf]
          %v391 = vld [vmem:[#allocation12 + $0x74] sm:$0xf]
          %v392 = vld [vmem:[#allocation12 + $0x78] sm:$0xf]
          %v393 = vld [vmem:[#allocation12 + $0x7c] sm:$0xf]
          %v398 = vunpack.c.l.b16 %v351
          %v399 = vunpack.c.h.b16 %v351
          %v400 = vunpack.c.l.b16 %v352
          %v401 = vunpack.c.h.b16 %v352
          %v402 = vunpack.c.l.b16 %v353
          %v403 = vunpack.c.h.b16 %v353
          %v404 = vunpack.c.l.b16 %v354
          %v405 = vunpack.c.h.b16 %v354
          %v406 = vpack.c.b16 %v400, %v398
          %v407 = vpack.c.b16 %v401, %v399
          %v408 = vpack.c.b16 %v404, %v402
          %v409 = vpack.c.b16 %v405, %v403
          %v446 = vunpack.c.l.b16 %v362
          %v447 = vunpack.c.l.b16 %v363
          %v448 = vunpack.c.l.b16 %v364
          %v449 = vunpack.c.l.b16 %v365
          %v450 = vunpack.c.l.b16 %v366
          %v451 = vunpack.c.l.b16 %v367
          %v452 = vunpack.c.l.b16 %v368
          %v453 = vunpack.c.l.b16 %v369
          %v454 = vunpack.c.l.b16 %v370
          %v455 = vunpack.c.l.b16 %v371
          %v456 = vunpack.c.l.b16 %v372
          %v457 = vunpack.c.l.b16 %v373
          %v458 = vunpack.c.l.b16 %v374
          %v459 = vunpack.c.l.b16 %v375
          %v460 = vunpack.c.l.b16 %v376
          %v461 = vunpack.c.l.b16 %v377
          %v462 = vunpack.c.l.b16 %v378
          %v463 = vunpack.c.l.b16 %v379
          %v464 = vunpack.c.l.b16 %v380
          %v465 = vunpack.c.l.b16 %v381
          %v466 = vunpack.c.l.b16 %v382
          %v467 = vunpack.c.l.b16 %v383
          %v468 = vunpack.c.l.b16 %v384
          %v469 = vunpack.c.l.b16 %v385
          %v470 = vunpack.c.l.b16 %v386
          %v471 = vunpack.c.l.b16 %v387
          %v472 = vunpack.c.l.b16 %v388
          %v473 = vunpack.c.l.b16 %v389
          %v474 = vunpack.c.l.b16 %v390
          %v475 = vunpack.c.l.b16 %v391
          %v476 = vunpack.c.l.b16 %v392
          %v477 = vunpack.c.l.b16 %v393
          %v478 = vpack.c.b16 %v447, %v446
          %v479 = vpack.c.b16 %v449, %v448
          %v480 = vpack.c.b16 %v451, %v450
          %v481 = vpack.c.b16 %v453, %v452
          %v482 = vpack.c.b16 %v455, %v454
          %v483 = vpack.c.b16 %v457, %v456
          %v484 = vpack.c.b16 %v459, %v458
          %v485 = vpack.c.b16 %v461, %v460
          %v486 = vpack.c.b16 %v463, %v462
          %v487 = vpack.c.b16 %v465, %v464
          %v488 = vpack.c.b16 %v467, %v466
          %v489 = vpack.c.b16 %v469, %v468
          %v490 = vpack.c.b16 %v471, %v470
          %v491 = vpack.c.b16 %v473, %v472
          %v492 = vpack.c.b16 %v475, %v474
          %v493 = vpack.c.b16 %v477, %v476
          %510 = vmatprep.subr.bf16.mxu0 0
          %511 = vmatpush1.bf16.msra.mxu0 %v478
          %512 = vmatprep.subr.bf16.mxu0 0
          %513 = vmatpush1.bf16.msra.mxu0 %v479
          %514 = vmatprep.subr.bf16.mxu0 0
          %515 = vmatpush1.bf16.msra.mxu0 %v480
          %516 = vmatprep.subr.bf16.mxu0 0
          %517 = vmatpush1.bf16.msra.mxu0 %v481
          %518 = vmatprep.subr.bf16.mxu0 0
          %519 = vmatpush1.bf16.msra.mxu0 %v482
          %520 = vmatprep.subr.bf16.mxu0 0
          %521 = vmatpush1.bf16.msra.mxu0 %v483
          %522 = vmatprep.subr.bf16.mxu0 0
          %523 = vmatpush1.bf16.msra.mxu0 %v484
          %524 = vmatprep.subr.bf16.mxu0 0
          %525 = vmatpush1.bf16.msra.mxu0 %v485
          %526 = vmatprep.subr.bf16.mxu0 0
          %527 = vmatpush1.bf16.msra.mxu0 %v486
          %528 = vmatprep.subr.bf16.mxu0 0
          %529 = vmatpush1.bf16.msra.mxu0 %v487
          %530 = vmatprep.subr.bf16.mxu0 0
          %531 = vmatpush1.bf16.msra.mxu0 %v488
          %532 = vmatprep.subr.bf16.mxu0 0
          %533 = vmatpush1.bf16.msra.mxu0 %v489
          %534 = vmatprep.subr.bf16.mxu0 0
          %535 = vmatpush1.bf16.msra.mxu0 %v490
          %536 = vmatprep.subr.bf16.mxu0 0
          %537 = vmatpush1.bf16.msra.mxu0 %v491
          %538 = vmatprep.subr.bf16.mxu0 0
          %539 = vmatpush1.bf16.msra.mxu0 %v492
          %540 = vmatprep.subr.bf16.mxu0 0
          %541 = vmatpush1.bf16.msra.mxu0 %v493
          %542 = vmatprep.mubr.bf16.mxu0 %v407
          %543 = vmatmul.mubr.bf16.gmra.mrb[0].mxu0 %v406
          %v544 = vpop.f32.mrb[0].mxu0
          %v545 = vadd.f32 0.0, %v544
          %v546 = vpop.f32.mrb[0].mxu0
          %v547 = vpop.f32.mrb[0].mxu0
          %v548 = vadd.f32 0.0, %v547
          %v549 = vpop.f32.mrb[0].mxu0
          %550 = vmatprep.mubr.bf16.mxu0 %v409
          %551 = vmatmul.mubr.bf16.gmra.mrb[0].mxu0 %v408
          %v552 = vpop.f32.mrb[0].mxu0
          %v553 = vadd.f32 0.0, %v552
          %v554 = vpop.f32.mrb[0].mxu0
          %v555 = vpop.f32.mrb[0].mxu0
          %v556 = vadd.f32 0.0, %v555
          %v557 = vpop.f32.mrb[0].mxu0
          %558 = vdwg.mxu0
          %v563 = vunpack.c.l.b16 %v355
          %v564 = vunpack.c.h.b16 %v355
          %v565 = vunpack.c.l.b16 %v356
          %v566 = vunpack.c.h.b16 %v356
          %v567 = vunpack.c.l.b16 %v357
          %v568 = vunpack.c.h.b16 %v357
          %v569 = vunpack.c.l.b16 %v358
          %v570 = vunpack.c.h.b16 %v358
          %v571 = vpack.c.b16 %v565, %v563
          %v572 = vpack.c.b16 %v566, %v564
          %v573 = vpack.c.b16 %v569, %v567
          %v574 = vpack.c.b16 %v570, %v568
          %579 = vmatprep.subr.bf16.mxu0 0
          %580 = vmatpush1.bf16.msra.mxu0 %v478
          %581 = vmatprep.subr.bf16.mxu0 0
          %582 = vmatpush1.bf16.msra.mxu0 %v479
          %583 = vmatprep.subr.bf16.mxu0 0
          %584 = vmatpush1.bf16.msra.mxu0 %v480
          %585 = vmatprep.subr.bf16.mxu0 0
          %586 = vmatpush1.bf16.msra.mxu0 %v481
          %587 = vmatprep.subr.bf16.mxu0 0
          %588 = vmatpush1.bf16.msra.mxu0 %v482
          %589 = vmatprep.subr.bf16.mxu0 0
          %590 = vmatpush1.bf16.msra.mxu0 %v483
          %591 = vmatprep.subr.bf16.mxu0 0
          %592 = vmatpush1.bf16.msra.mxu0 %v484
          %593 = vmatprep.subr.bf16.mxu0 0
          %594 = vmatpush1.bf16.msra.mxu0 %v485
          %595 = vmatprep.subr.bf16.mxu0 0
          %596 = vmatpush1.bf16.msra.mxu0 %v486
          %597 = vmatprep.subr.bf16.mxu0 0
          %598 = vmatpush1.bf16.msra.mxu0 %v487
          %599 = vmatprep.subr.bf16.mxu0 0
          %600 = vmatpush1.bf16.msra.mxu0 %v488
          %601 = vmatprep.subr.bf16.mxu0 0
          %602 = vmatpush1.bf16.msra.mxu0 %v489
          %603 = vmatprep.subr.bf16.mxu0 0
          %604 = vmatpush1.bf16.msra.mxu0 %v490
          %605 = vmatprep.subr.bf16.mxu0 0
          %606 = vmatpush1.bf16.msra.mxu0 %v491
          %607 = vmatprep.subr.bf16.mxu0 0
          %608 = vmatpush1.bf16.msra.mxu0 %v492
          %609 = vmatprep.subr.bf16.mxu0 0
          %610 = vmatpush1.bf16.msra.mxu0 %v493
          %611 = vmatprep.mubr.bf16.mxu0 %v572
          %612 = vmatmul.mubr.bf16.gmra.mrb[0].mxu0 %v571
          %v613 = vpop.f32.mrb[0].mxu0
          %v614 = vadd.f32 0.0, %v613
          %v615 = vpop.f32.mrb[0].mxu0
          %v616 = vpop.f32.mrb[0].mxu0
          %v617 = vadd.f32 0.0, %v616
          %v618 = vpop.f32.mrb[0].mxu0
          %619 = vmatprep.mubr.bf16.mxu0 %v574
          %620 = vmatmul.mubr.bf16.gmra.mrb[0].mxu0 %v573
          %v621 = vpop.f32.mrb[0].mxu0
          %v622 = vadd.f32 0.0, %v621
          %v623 = vpop.f32.mrb[0].mxu0
          %v624 = vpop.f32.mrb[0].mxu0
          %v625 = vadd.f32 0.0, %v624
          %v626 = vpop.f32.mrb[0].mxu0
          %627 = vdwg.mxu0
          %v628 = vld [vmem:[#allocation2] sm:$0x1]
          %v629 = vadd.f32 %v545, %v548
          %v630 = vadd.f32 %v629, %v553
          %v631 = vadd.f32 %v630, %v556
          %v632 = vrot.slane %v631, 4
          %v633 = vadd.f32 %v631, %v632
          %v634 = vrot.slane %v633, 2
          %v635 = vadd.f32 %v633, %v634
          %v636 = vrot.slane %v635, 1
          %v637 = vadd.f32 %v635, %v636
          %v638 = vadd.f32 %v628, %v637
          %639 = vst [vmem:[#allocation2] sm:$0x1] %v638
          %v640 = vld [vmem:[#allocation3] sm:$0x1]
          %v641 = vmul.f32 %v545, %v545
          %v642 = vmul.f32 %v548, %v548
          %v643 = vmul.f32 %v553, %v553
          %v644 = vmul.f32 %v556, %v556
          %v645 = vadd.f32 %v641, %v642
          %v646 = vadd.f32 %v645, %v643
          %v647 = vadd.f32 %v646, %v644
          %v648 = vrot.slane %v647, 4
          %v649 = vadd.f32 %v647, %v648
          %v650 = vrot.slane %v649, 2
          %v651 = vadd.f32 %v649, %v650
          %v652 = vrot.slane %v651, 1
          %v653 = vadd.f32 %v651, %v652
          %v654 = vadd.f32 %v640, %v653
          %655 = vst [vmem:[#allocation3] sm:$0x1] %v654
          %v656 = vld [vmem:[#allocation4] sm:$0x1]
          %v657 = vadd.f32 %v614, %v617
          %v658 = vadd.f32 %v657, %v622
          %v659 = vadd.f32 %v658, %v625
          %v660 = vrot.slane %v659, 4
          %v661 = vadd.f32 %v659, %v660
          %v662 = vrot.slane %v661, 2
          %v663 = vadd.f32 %v661, %v662
          %v664 = vrot.slane %v663, 1
          %v665 = vadd.f32 %v663, %v664
          %v666 = vadd.f32 %v656, %v665
          %667 = vst [vmem:[#allocation4] sm:$0x1] %v666
          %v668 = vld [vmem:[#allocation5] sm:$0x1]
          %v669 = vmul.f32 %v614, %v614
          %v670 = vmul.f32 %v617, %v617
          %v671 = vmul.f32 %v622, %v622
          %v672 = vmul.f32 %v625, %v625
          %v673 = vadd.f32 %v669, %v670
          %v674 = vadd.f32 %v673, %v671
          %v675 = vadd.f32 %v674, %v672
          %v676 = vrot.slane %v675, 4
          %v677 = vadd.f32 %v675, %v676
          %v678 = vrot.slane %v677, 2
          %v679 = vadd.f32 %v677, %v678
          %v680 = vrot.slane %v679, 1
          %v681 = vadd.f32 %v679, %v680
          %v682 = vadd.f32 %v668, %v681
          %683 = vst [vmem:[#allocation5] sm:$0x1] %v682
        $region64: #{tpu_custom_call.1} parent=39 // pred_fallthru
          _
        %p684 = scmp.eq.s32.totalorder %s28, 1
        // Predicated region
        $region65: #{tpu_custom_call.1} parent=39 // pred_check
          %p685 = pneg %p684
        $region66: #{tpu_custom_call.1} parent=39 // pred_check_branch
          %687 = sbr.rel (%p685) target = $region68
        $region67: #{tpu_custom_call.1} parent=39 // pred_region
          %v688 = vld [vmem:[#allocation2] sm:$0x1]
          %v689 = vmul.f32 %v688, 0.015625
          %v690 = vld [vmem:[#allocation4] sm:$0x1]
          %v691 = vmul.f32 %v690, 0.015625
          %v692 = vld [vmem:[#allocation3] sm:$0x1]
          %v693 = vmul.f32 %v692, 0.015625
          %v694 = vmul.f32 %v689, %v689
          %v695 = vsub.f32 %v693, %v694
          %v696 = vmax.f32 %v695, 0.0
          %v697 = vld [vmem:[#allocation5] sm:$0x1]
          %v698 = vmul.f32 %v697, 0.015625
          %v699 = vmul.f32 %v691, %v691
          %v700 = vsub.f32 %v698, %v699
          %v701 = vmax.f32 %v700, 0.0
          %v702 = vadd.f32 %v696, 1e-05
          %v703 = vrsqrt.pop %v702
          %v704 = vadd.f32 %v701, 1e-05
          %v705 = vrsqrt.pop %v704
          %v706 = vld [vmem:[#allocation12] sm:$0xf]
          %v707 = vld [vmem:[#allocation12 + $0x4] sm:$0xf]
          %v708 = vld [vmem:[#allocation12 + $0x8] sm:$0xf]
          %v709 = vld [vmem:[#allocation12 + $0xc] sm:$0xf]
          %v710 = vld [vmem:[#allocation12 + $0x10] sm:$0xf]
          %v711 = vld [vmem:[#allocation12 + $0x14] sm:$0xf]
          %v712 = vld [vmem:[#allocation12 + $0x18] sm:$0xf]
          %v713 = vld [vmem:[#allocation12 + $0x1c] sm:$0xf]
          %v714 = vld [vmem:[#allocation12 + $0x20] sm:$0xf]
          %v715 = vld [vmem:[#allocation12 + $0x24] sm:$0xf]
          %v716 = vld [vmem:[#allocation12 + $0x28] sm:$0xf]
          %v717 = vld [vmem:[#allocation12 + $0x2c] sm:$0xf]
          %v718 = vld [vmem:[#allocation12 + $0x30] sm:$0xf]
          %v719 = vld [vmem:[#allocation12 + $0x34] sm:$0xf]
          %v720 = vld [vmem:[#allocation12 + $0x38] sm:$0xf]
          %v721 = vld [vmem:[#allocation12 + $0x3c] sm:$0xf]
          %v722 = vld [vmem:[#allocation12 + $0x40] sm:$0xf]
          %v723 = vld [vmem:[#allocation12 + $0x44] sm:$0xf]
          %v724 = vld [vmem:[#allocation12 + $0x48] sm:$0xf]
          %v725 = vld [vmem:[#allocation12 + $0x4c] sm:$0xf]
          %v726 = vld [vmem:[#allocation12 + $0x50] sm:$0xf]
          %v727 = vld [vmem:[#allocation12 + $0x54] sm:$0xf]
          %v728 = vld [vmem:[#allocation12 + $0x58] sm:$0xf]
          %v729 = vld [vmem:[#allocation12 + $0x5c] sm:$0xf]
          %v730 = vld [vmem:[#allocation12 + $0x60] sm:$0xf]
          %v731 = vld [vmem:[#allocation12 + $0x64] sm:$0xf]
          %v732 = vld [vmem:[#allocation12 + $0x68] sm:$0xf]
          %v733 = vld [vmem:[#allocation12 + $0x6c] sm:$0xf]
          %v734 = vld [vmem:[#allocation12 + $0x70] sm:$0xf]
          %v735 = vld [vmem:[#allocation12 + $0x74] sm:$0xf]
          %v736 = vld [vmem:[#allocation12 + $0x78] sm:$0xf]
          %v737 = vld [vmem:[#allocation12 + $0x7c] sm:$0xf]
          %v742 = vunpack.c.l.b16 %v351
          %v743 = vunpack.c.h.b16 %v351
          %v744 = vunpack.c.l.b16 %v352
          %v745 = vunpack.c.h.b16 %v352
          %v746 = vunpack.c.l.b16 %v353
          %v747 = vunpack.c.h.b16 %v353
          %v748 = vunpack.c.l.b16 %v354
          %v749 = vunpack.c.h.b16 %v354
          %v750 = vpack.c.b16 %v744, %v742
          %v751 = vpack.c.b16 %v745, %v743
          %v752 = vpack.c.b16 %v748, %v746
          %v753 = vpack.c.b16 %v749, %v747
          %v790 = vunpack.c.l.b16 %v706
          %v791 = vunpack.c.l.b16 %v707
          %v792 = vunpack.c.l.b16 %v708
          %v793 = vunpack.c.l.b16 %v709
          %v794 = vunpack.c.l.b16 %v710
          %v795 = vunpack.c.l.b16 %v711
          %v796 = vunpack.c.l.b16 %v712
          %v797 = vunpack.c.l.b16 %v713
          %v798 = vunpack.c.l.b16 %v714
          %v799 = vunpack.c.l.b16 %v715
          %v800 = vunpack.c.l.b16 %v716
          %v801 = vunpack.c.l.b16 %v717
          %v802 = vunpack.c.l.b16 %v718
          %v803 = vunpack.c.l.b16 %v719
          %v804 = vunpack.c.l.b16 %v720
          %v805 = vunpack.c.l.b16 %v721
          %v806 = vunpack.c.l.b16 %v722
          %v807 = vunpack.c.l.b16 %v723
          %v808 = vunpack.c.l.b16 %v724
          %v809 = vunpack.c.l.b16 %v725
          %v810 = vunpack.c.l.b16 %v726
          %v811 = vunpack.c.l.b16 %v727
          %v812 = vunpack.c.l.b16 %v728
          %v813 = vunpack.c.l.b16 %v729
          %v814 = vunpack.c.l.b16 %v730
          %v815 = vunpack.c.l.b16 %v731
          %v816 = vunpack.c.l.b16 %v732
          %v817 = vunpack.c.l.b16 %v733
          %v818 = vunpack.c.l.b16 %v734
          %v819 = vunpack.c.l.b16 %v735
          %v820 = vunpack.c.l.b16 %v736
          %v821 = vunpack.c.l.b16 %v737
          %v822 = vpack.c.b16 %v791, %v790
          %v823 = vpack.c.b16 %v793, %v792
          %v824 = vpack.c.b16 %v795, %v794
          %v825 = vpack.c.b16 %v797, %v796
          %v826 = vpack.c.b16 %v799, %v798
          %v827 = vpack.c.b16 %v801, %v800
          %v828 = vpack.c.b16 %v803, %v802
          %v829 = vpack.c.b16 %v805, %v804
          %v830 = vpack.c.b16 %v807, %v806
          %v831 = vpack.c.b16 %v809, %v808
          %v832 = vpack.c.b16 %v811, %v810
          %v833 = vpack.c.b16 %v813, %v812
          %v834 = vpack.c.b16 %v815, %v814
          %v835 = vpack.c.b16 %v817, %v816
          %v836 = vpack.c.b16 %v819, %v818
          %v837 = vpack.c.b16 %v821, %v820
          %854 = vmatprep.subr.bf16.mxu0 0
          %855 = vmatpush1.bf16.msra.mxu0 %v822
          %856 = vmatprep.subr.bf16.mxu0 0
          %857 = vmatpush1.bf16.msra.mxu0 %v823
          %858 = vmatprep.subr.bf16.mxu0 0
          %859 = vmatpush1.bf16.msra.mxu0 %v824
          %860 = vmatprep.subr.bf16.mxu0 0
          %861 = vmatpush1.bf16.msra.mxu0 %v825
          %862 = vmatprep.subr.bf16.mxu0 0
          %863 = vmatpush1.bf16.msra.mxu0 %v826
          %864 = vmatprep.subr.bf16.mxu0 0
          %865 = vmatpush1.bf16.msra.mxu0 %v827
          %866 = vmatprep.subr.bf16.mxu0 0
          %867 = vmatpush1.bf16.msra.mxu0 %v828
          %868 = vmatprep.subr.bf16.mxu0 0
          %869 = vmatpush1.bf16.msra.mxu0 %v829
          %870 = vmatprep.subr.bf16.mxu0 0
          %871 = vmatpush1.bf16.msra.mxu0 %v830
          %872 = vmatprep.subr.bf16.mxu0 0
          %873 = vmatpush1.bf16.msra.mxu0 %v831
          %874 = vmatprep.subr.bf16.mxu0 0
          %875 = vmatpush1.bf16.msra.mxu0 %v832
          %876 = vmatprep.subr.bf16.mxu0 0
          %877 = vmatpush1.bf16.msra.mxu0 %v833
          %878 = vmatprep.subr.bf16.mxu0 0
          %879 = vmatpush1.bf16.msra.mxu0 %v834
          %880 = vmatprep.subr.bf16.mxu0 0
          %881 = vmatpush1.bf16.msra.mxu0 %v835
          %882 = vmatprep.subr.bf16.mxu0 0
          %883 = vmatpush1.bf16.msra.mxu0 %v836
          %884 = vmatprep.subr.bf16.mxu0 0
          %885 = vmatpush1.bf16.msra.mxu0 %v837
          %886 = vmatprep.mubr.bf16.mxu0 %v751
          %887 = vmatmul.mubr.bf16.gmra.mrb[0].mxu0 %v750
          %v888 = vpop.f32.mrb[0].mxu0
          %v889 = vadd.f32 0.0, %v888
          %v890 = vpop.f32.mrb[0].mxu0
          %v891 = vpop.f32.mrb[0].mxu0
          %v892 = vadd.f32 0.0, %v891
          %v893 = vpop.f32.mrb[0].mxu0
          %894 = vmatprep.mubr.bf16.mxu0 %v753
          %895 = vmatmul.mubr.bf16.gmra.mrb[0].mxu0 %v752
          %v896 = vpop.f32.mrb[0].mxu0
          %v897 = vadd.f32 0.0, %v896
          %v898 = vpop.f32.mrb[0].mxu0
          %v899 = vpop.f32.mrb[0].mxu0
          %v900 = vadd.f32 0.0, %v899
          %v901 = vpop.f32.mrb[0].mxu0
          %902 = vdwg.mxu0
          %v907 = vunpack.c.l.b16 %v355
          %v908 = vunpack.c.h.b16 %v355
          %v909 = vunpack.c.l.b16 %v356
          %v910 = vunpack.c.h.b16 %v356
          %v911 = vunpack.c.l.b16 %v357
          %v912 = vunpack.c.h.b16 %v357
          %v913 = vunpack.c.l.b16 %v358
          %v914 = vunpack.c.h.b16 %v358
          %v915 = vpack.c.b16 %v909, %v907
          %v916 = vpack.c.b16 %v910, %v908
          %v917 = vpack.c.b16 %v913, %v911
          %v918 = vpack.c.b16 %v914, %v912
          %923 = vmatprep.subr.bf16.mxu0 0
          %924 = vmatpush1.bf16.msra.mxu0 %v822
          %925 = vmatprep.subr.bf16.mxu0 0
          %926 = vmatpush1.bf16.msra.mxu0 %v823
          %927 = vmatprep.subr.bf16.mxu0 0
          %928 = vmatpush1.bf16.msra.mxu0 %v824
          %929 = vmatprep.subr.bf16.mxu0 0
          %930 = vmatpush1.bf16.msra.mxu0 %v825
          %931 = vmatprep.subr.bf16.mxu0 0
          %932 = vmatpush1.bf16.msra.mxu0 %v826
          %933 = vmatprep.subr.bf16.mxu0 0
          %934 = vmatpush1.bf16.msra.mxu0 %v827
          %935 = vmatprep.subr.bf16.mxu0 0
          %936 = vmatpush1.bf16.msra.mxu0 %v828
          %937 = vmatprep.subr.bf16.mxu0 0
          %938 = vmatpush1.bf16.msra.mxu0 %v829
          %939 = vmatprep.subr.bf16.mxu0 0
          %940 = vmatpush1.bf16.msra.mxu0 %v830
          %941 = vmatprep.subr.bf16.mxu0 0
          %942 = vmatpush1.bf16.msra.mxu0 %v831
          %943 = vmatprep.subr.bf16.mxu0 0
          %944 = vmatpush1.bf16.msra.mxu0 %v832
          %945 = vmatprep.subr.bf16.mxu0 0
          %946 = vmatpush1.bf16.msra.mxu0 %v833
          %947 = vmatprep.subr.bf16.mxu0 0
          %948 = vmatpush1.bf16.msra.mxu0 %v834
          %949 = vmatprep.subr.bf16.mxu0 0
          %950 = vmatpush1.bf16.msra.mxu0 %v835
          %951 = vmatprep.subr.bf16.mxu0 0
          %952 = vmatpush1.bf16.msra.mxu0 %v836
          %953 = vmatprep.subr.bf16.mxu0 0
          %954 = vmatpush1.bf16.msra.mxu0 %v837
          %955 = vmatprep.mubr.bf16.mxu0 %v916
          %956 = vmatmul.mubr.bf16.gmra.mrb[0].mxu0 %v915
          %v957 = vpop.f32.mrb[0].mxu0
          %v958 = vadd.f32 0.0, %v957
          %v959 = vpop.f32.mrb[0].mxu0
          %v960 = vpop.f32.mrb[0].mxu0
          %v961 = vadd.f32 0.0, %v960
          %v962 = vpop.f32.mrb[0].mxu0
          %963 = vmatprep.mubr.bf16.mxu0 %v918
          %964 = vmatmul.mubr.bf16.gmra.mrb[0].mxu0 %v917
          %v965 = vpop.f32.mrb[0].mxu0
          %v966 = vadd.f32 0.0, %v965
          %v967 = vpop.f32.mrb[0].mxu0
          %v968 = vpop.f32.mrb[0].mxu0
          %v969 = vadd.f32 0.0, %v968
          %v970 = vpop.f32.mrb[0].mxu0
          %971 = vdwg.mxu0
          %v973 = vlaneseq
          %v974 = vshrl.u32 %v973, 7
          %v975 = vsub.s32 0, %v974
          %v976 = vrot.slane %v689, %v975
          %v978 = vsub.f32 %v889, %v976
          %v979 = vsub.f32 %v892, %v976
          %v980 = vsub.f32 %v897, %v976
          %v981 = vsub.f32 %v900, %v976
          %v983 = vlaneseq
          %v984 = vshrl.u32 %v983, 7
          %v985 = vsub.s32 0, %v984
          %v986 = vrot.slane %v703, %v985
          %v988 = vmul.f32 %v978, %v986
          %v989 = vmul.f32 %v979, %v986
          %v990 = vmul.f32 %v980, %v986
          %v991 = vmul.f32 %v981, %v986
          %v992 = vmax.f32 %v988, 0.0
          %v993 = vmax.f32 %v989, 0.0
          %v994 = vmax.f32 %v990, 0.0
          %v995 = vmax.f32 %v991, 0.0
          %v996 = vpack.c.bf16 %v993, %v992
          %v997 = vpack.c.bf16 %v995, %v994
          %v999 = vlaneseq
          %v1000 = vshrl.u32 %v999, 7
          %v1001 = vsub.s32 0, %v1000
          %v1002 = vrot.slane %v691, %v1001
          %v1004 = vsub.f32 %v958, %v1002
          %v1005 = vsub.f32 %v961, %v1002
          %v1006 = vsub.f32 %v966, %v1002
          %v1007 = vsub.f32 %v969, %v1002
          %v1009 = vlaneseq
          %v1010 = vshrl.u32 %v1009, 7
          %v1011 = vsub.s32 0, %v1010
          %v1012 = vrot.slane %v705, %v1011
          %v1014 = vmul.f32 %v1004, %v1012
          %v1015 = vmul.f32 %v1005, %v1012
          %v1016 = vmul.f32 %v1006, %v1012
          %v1017 = vmul.f32 %v1007, %v1012
          %v1018 = vmax.f32 %v1014, 0.0
          %v1019 = vmax.f32 %v1015, 0.0
          %v1020 = vmax.f32 %v1016, 0.0
          %v1021 = vmax.f32 %v1017, 0.0
          %v1022 = vpack.c.bf16 %v1019, %v1018
          %v1023 = vpack.c.bf16 %v1021, %v1020
          %v1024 = vld [vmem:[%s4] sm:$0x3]
          %v1025 = vld [vmem:[#allocation13] sm:$0xff]
          %v1026 = vld [vmem:[#allocation13 + $0x8] sm:$0xff]
          %v1027 = vld [vmem:[#allocation13 + $0x10] sm:$0xff]
          %v1028 = vld [vmem:[#allocation13 + $0x18] sm:$0xff]
          %v1029 = vld [vmem:[#allocation13 + $0x20] sm:$0xff]
          %v1030 = vld [vmem:[#allocation13 + $0x28] sm:$0xff]
          %v1031 = vld [vmem:[#allocation13 + $0x30] sm:$0xff]
          %v1032 = vld [vmem:[#allocation13 + $0x38] sm:$0xff]
          %v1033 = vld [vmem:[#allocation13 + $0x40] sm:$0xff]
          %v1034 = vld [vmem:[#allocation13 + $0x48] sm:$0xff]
          %v1035 = vld [vmem:[#allocation13 + $0x50] sm:$0xff]
          %v1036 = vld [vmem:[#allocation13 + $0x58] sm:$0xff]
          %v1037 = vld [vmem:[#allocation13 + $0x60] sm:$0xff]
          %v1038 = vld [vmem:[#allocation13 + $0x68] sm:$0xff]
          %v1039 = vld [vmem:[#allocation13 + $0x70] sm:$0xff]
          %v1040 = vld [vmem:[#allocation13 + $0x78] sm:$0xff]
          %v1042 = vlaneseq
          %v1043 = vshrl.u32 %v1042, 7
          %v1044 = vsub.s32 0, %v1043
          %v1045 = vrot.slane %v1024, %v1044
          %v1046 = vlaneseq
          %v1047 = vshrl.u32 %v1046, 7
          %v1048 = vsub.s32 1, %v1047
          %v1049 = vrot.slane %v1024, %v1048
          %v1068 = vunpack.c.l.b16 %v1025
          %v1069 = vunpack.c.h.b16 %v1025
          %v1070 = vunpack.c.l.b16 %v1026
          %v1071 = vunpack.c.h.b16 %v1026
          %v1072 = vunpack.c.l.b16 %v1027
          %v1073 = vunpack.c.h.b16 %v1027
          %v1074 = vunpack.c.l.b16 %v1028
          %v1075 = vunpack.c.h.b16 %v1028
          %v1076 = vunpack.c.l.b16 %v1029
          %v1077 = vunpack.c.h.b16 %v1029
          %v1078 = vunpack.c.l.b16 %v1030
          %v1079 = vunpack.c.h.b16 %v1030
          %v1080 = vunpack.c.l.b16 %v1031
          %v1081 = vunpack.c.h.b16 %v1031
          %v1082 = vunpack.c.l.b16 %v1032
          %v1083 = vunpack.c.h.b16 %v1032
          %v1084 = vunpack.c.l.b16 %v1033
          %v1085 = vunpack.c.h.b16 %v1033
          %v1086 = vunpack.c.l.b16 %v1034
          %v1087 = vunpack.c.h.b16 %v1034
          %v1088 = vunpack.c.l.b16 %v1035
          %v1089 = vunpack.c.h.b16 %v1035
          %v1090 = vunpack.c.l.b16 %v1036
          %v1091 = vunpack.c.h.b16 %v1036
          %v1092 = vunpack.c.l.b16 %v1037
          %v1093 = vunpack.c.h.b16 %v1037
          %v1094 = vunpack.c.l.b16 %v1038
          %v1095 = vunpack.c.h.b16 %v1038
          %v1096 = vunpack.c.l.b16 %v1039
          %v1097 = vunpack.c.h.b16 %v1039
          %v1098 = vunpack.c.l.b16 %v1040
          %v1099 = vunpack.c.h.b16 %v1040
          %v1100 = vpack.c.b16 %v1070, %v1068
          %v1101 = vpack.c.b16 %v1071, %v1069
          %v1102 = vpack.c.b16 %v1074, %v1072
          %v1103 = vpack.c.b16 %v1075, %v1073
          %v1104 = vpack.c.b16 %v1078, %v1076
          %v1105 = vpack.c.b16 %v1079, %v1077
          %v1106 = vpack.c.b16 %v1082, %v1080
          %v1107 = vpack.c.b16 %v1083, %v1081
          %v1108 = vpack.c.b16 %v1086, %v1084
          %v1109 = vpack.c.b16 %v1087, %v1085
          %v1110 = vpack.c.b16 %v1090, %v1088
          %v1111 = vpack.c.b16 %v1091, %v1089
          %v1112 = vpack.c.b16 %v1094, %v1092
          %v1113 = vpack.c.b16 %v1095, %v1093
          %v1114 = vpack.c.b16 %v1098, %v1096
          %v1115 = vpack.c.b16 %v1099, %v1097
          %1132 = vmatprep.subr.bf16.mxu0 %v1101
          %1133 = vmatpush1.bf16.msra.mxu0 %v1100
          %1134 = vmatprep.subr.bf16.mxu0 %v1103
          %1135 = vmatpush1.bf16.msra.mxu0 %v1102
          %1136 = vmatprep.subr.bf16.mxu0 %v1105
          %1137 = vmatpush1.bf16.msra.mxu0 %v1104
          %1138 = vmatprep.subr.bf16.mxu0 %v1107
          %1139 = vmatpush1.bf16.msra.mxu0 %v1106
          %1140 = vmatprep.subr.bf16.mxu0 %v1109
          %1141 = vmatpush1.bf16.msra.mxu0 %v1108
          %1142 = vmatprep.subr.bf16.mxu0 %v1111
          %1143 = vmatpush1.bf16.msra.mxu0 %v1110
          %1144 = vmatprep.subr.bf16.mxu0 %v1113
          %1145 = vmatpush1.bf16.msra.mxu0 %v1112
          %1146 = vmatprep.subr.bf16.mxu0 %v1115
          %1147 = vmatpush1.bf16.msra.mxu0 %v1114
          %1148 = vmatprep.subr.bf16.mxu0 0
          %1149 = vmatpush1.bf16.msra.mxu0 0
          %1150 = vmatprep.subr.bf16.mxu0 0
          %1151 = vmatpush1.bf16.msra.mxu0 0
          %1152 = vmatprep.subr.bf16.mxu0 0
          %1153 = vmatpush1.bf16.msra.mxu0 0
          %1154 = vmatprep.subr.bf16.mxu0 0
          %1155 = vmatpush1.bf16.msra.mxu0 0
          %1156 = vmatprep.subr.bf16.mxu0 0
          %1157 = vmatpush1.bf16.msra.mxu0 0
          %1158 = vmatprep.subr.bf16.mxu0 0
          %1159 = vmatpush1.bf16.msra.mxu0 0
          %1160 = vmatprep.subr.bf16.mxu0 0
          %1161 = vmatpush1.bf16.msra.mxu0 0
          %1162 = vmatprep.subr.bf16.mxu0 0
          %1163 = vmatpush1.bf16.msra.mxu0 0
          %1164 = vmatprep.mubr.bf16.mxu0 0
          %1165 = vmatmul.mubr.bf16.gmra.mrb[0].mxu0 %v996
          %v1166 = vpop.f32.mrb[0].mxu0
          %v1167 = vadd.f32 %v1045, %v1166
          %v1168 = vpop.f32.mrb[0].mxu0
          %v1169 = vadd.f32 %v1049, %v1168
          %v1170 = vpop.f32.mrb[0].mxu0
          %v1171 = vadd.f32 %v1045, %v1170
          %v1172 = vpop.f32.mrb[0].mxu0
          %v1173 = vadd.f32 %v1049, %v1172
          %1174 = vmatprep.mubr.bf16.mxu0 0
          %1175 = vmatmul.mubr.bf16.gmra.mrb[0].mxu0 %v997
          %v1176 = vpop.f32.mrb[0].mxu0
          %v1177 = vadd.f32 %v1045, %v1176
          %v1178 = vpop.f32.mrb[0].mxu0
          %v1179 = vadd.f32 %v1049, %v1178
          %v1180 = vpop.f32.mrb[0].mxu0
          %v1181 = vadd.f32 %v1045, %v1180
          %v1182 = vpop.f32.mrb[0].mxu0
          %v1183 = vadd.f32 %v1049, %v1182
          %1184 = vdwg.mxu0
          %1185 = vmatprep.subr.bf16.mxu0 %v1101
          %1186 = vmatpush1.bf16.msra.mxu0 %v1100
          %1187 = vmatprep.subr.bf16.mxu0 %v1103
          %1188 = vmatpush1.bf16.msra.mxu0 %v1102
          %1189 = vmatprep.subr.bf16.mxu0 %v1105
          %1190 = vmatpush1.bf16.msra.mxu0 %v1104
          %1191 = vmatprep.subr.bf16.mxu0 %v1107
          %1192 = vmatpush1.bf16.msra.mxu0 %v1106
          %1193 = vmatprep.subr.bf16.mxu0 %v1109
          %1194 = vmatpush1.bf16.msra.mxu0 %v1108
          %1195 = vmatprep.subr.bf16.mxu0 %v1111
          %1196 = vmatpush1.bf16.msra.mxu0 %v1110
          %1197 = vmatprep.subr.bf16.mxu0 %v1113
          %1198 = vmatpush1.bf16.msra.mxu0 %v1112
          %1199 = vmatprep.subr.bf16.mxu0 %v1115
          %1200 = vmatpush1.bf16.msra.mxu0 %v1114
          %1201 = vmatprep.subr.bf16.mxu0 0
          %1202 = vmatpush1.bf16.msra.mxu0 0
          %1203 = vmatprep.subr.bf16.mxu0 0
          %1204 = vmatpush1.bf16.msra.mxu0 0
          %1205 = vmatprep.subr.bf16.mxu0 0
          %1206 = vmatpush1.bf16.msra.mxu0 0
          %1207 = vmatprep.subr.bf16.mxu0 0
          %1208 = vmatpush1.bf16.msra.mxu0 0
          %1209 = vmatprep.subr.bf16.mxu0 0
          %1210 = vmatpush1.bf16.msra.mxu0 0
          %1211 = vmatprep.subr.bf16.mxu0 0
          %1212 = vmatpush1.bf16.msra.mxu0 0
          %1213 = vmatprep.subr.bf16.mxu0 0
          %1214 = vmatpush1.bf16.msra.mxu0 0
          %1215 = vmatprep.subr.bf16.mxu0 0
          %1216 = vmatpush1.bf16.msra.mxu0 0
          %1217 = vmatprep.mubr.bf16.mxu0 0
          %1218 = vmatmul.mubr.bf16.gmra.mrb[0].mxu0 %v1022
          %v1219 = vpop.f32.mrb[0].mxu0
          %v1220 = vadd.f32 %v1045, %v1219
          %v1221 = vpop.f32.mrb[0].mxu0
          %v1222 = vadd.f32 %v1049, %v1221
          %v1223 = vpop.f32.mrb[0].mxu0
          %v1224 = vadd.f32 %v1045, %v1223
          %v1225 = vpop.f32.mrb[0].mxu0
          %v1226 = vadd.f32 %v1049, %v1225
          %1227 = vmatprep.mubr.bf16.mxu0 0
          %1228 = vmatmul.mubr.bf16.gmra.mrb[0].mxu0 %v1023
          %v1229 = vpop.f32.mrb[0].mxu0
          %v1230 = vadd.f32 %v1045, %v1229
          %v1231 = vpop.f32.mrb[0].mxu0
          %v1232 = vadd.f32 %v1049, %v1231
          %v1233 = vpop.f32.mrb[0].mxu0
          %v1234 = vadd.f32 %v1045, %v1233
          %v1235 = vpop.f32.mrb[0].mxu0
          %v1236 = vadd.f32 %v1049, %v1235
          %1237 = vdwg.mxu0
          %v1238 = vld [vmem:[%s270] sm:$0xff]
          %v1239 = vld [vmem:[%s270 + $0x8] sm:$0xff]
          %v1240 = vld [vmem:[%s270 + $0x10] sm:$0xff]
          %v1241 = vld [vmem:[%s270 + $0x18] sm:$0xff]
          %v1242 = vunpack.c.l.bf16 %v1238
          %v1243 = vunpack.c.h.bf16 %v1238
          %v1244 = vunpack.c.l.bf16 %v1239
          %v1245 = vunpack.c.h.bf16 %v1239
          %v1246 = vunpack.c.l.bf16 %v1240
          %v1247 = vunpack.c.h.bf16 %v1240
          %v1248 = vunpack.c.l.bf16 %v1241
          %v1249 = vunpack.c.h.bf16 %v1241
          %v1250 = vld [vmem:[%s279] sm:$0xff]
          %v1251 = vld [vmem:[%s279 + $0x8] sm:$0xff]
          %v1252 = vld [vmem:[%s279 + $0x10] sm:$0xff]
          %v1253 = vld [vmem:[%s279 + $0x18] sm:$0xff]
          %v1254 = vunpack.c.l.bf16 %v1250
          %v1255 = vunpack.c.h.bf16 %v1250
          %v1256 = vunpack.c.l.bf16 %v1251
          %v1257 = vunpack.c.h.bf16 %v1251
          %v1258 = vunpack.c.l.bf16 %v1252
          %v1259 = vunpack.c.h.bf16 %v1252
          %v1260 = vunpack.c.l.bf16 %v1253
          %v1261 = vunpack.c.h.bf16 %v1253
          %v1262 = vmul.f32 %v1167, %v1254
          %v1263 = vmul.f32 %v1169, %v1255
          %v1264 = vmul.f32 %v1171, %v1256
          %v1265 = vmul.f32 %v1173, %v1257
          %v1266 = vmul.f32 %v1177, %v1258
          %v1267 = vmul.f32 %v1179, %v1259
          %v1268 = vmul.f32 %v1181, %v1260
          %v1269 = vmul.f32 %v1183, %v1261
          %v1270 = vadd.f32 %v1262, %v1263
          %1271 = vadd.xlane.f32.xlu0 %v1270
          %v1272 = vpop.xlane.xlu0 %1271
          %v1273 = vadd.f32 %v1264, %v1265
          %1274 = vadd.xlane.f32.xlu0 %v1273
          %v1275 = vpop.xlane.xlu0 %1274
          %v1276 = vadd.f32 %v1266, %v1267
          %1277 = vadd.xlane.f32.xlu0 %v1276
          %v1278 = vpop.xlane.xlu0 %1277
          %v1279 = vadd.f32 %v1268, %v1269
          %1280 = vadd.xlane.f32.xlu0 %v1279
          %v1281 = vpop.xlane.xlu0 %1280
          %v1282 = vmul.f32 %v1167, %v1167
          %v1283 = vmul.f32 %v1169, %v1169
          %v1284 = vmul.f32 %v1171, %v1171
          %v1285 = vmul.f32 %v1173, %v1173
          %v1286 = vmul.f32 %v1177, %v1177
          %v1287 = vmul.f32 %v1179, %v1179
          %v1288 = vmul.f32 %v1181, %v1181
          %v1289 = vmul.f32 %v1183, %v1183
          %v1290 = vadd.f32 %v1282, %v1283
          %1291 = vadd.xlane.f32.xlu0 %v1290
          %v1292 = vpop.xlane.xlu0 %1291
          %v1293 = vadd.f32 %v1284, %v1285
          %1294 = vadd.xlane.f32.xlu0 %v1293
          %v1295 = vpop.xlane.xlu0 %1294
          %v1296 = vadd.f32 %v1286, %v1287
          %1297 = vadd.xlane.f32.xlu0 %v1296
          %v1298 = vpop.xlane.xlu0 %1297
          %v1299 = vadd.f32 %v1288, %v1289
          %1300 = vadd.xlane.f32.xlu0 %v1299
          %v1301 = vpop.xlane.xlu0 %1300
          %v1302 = vmul.f32 %v1254, %v1254
          %v1303 = vmul.f32 %v1255, %v1255
          %v1304 = vmul.f32 %v1256, %v1256
          %v1305 = vmul.f32 %v1257, %v1257
          %v1306 = vmul.f32 %v1258, %v1258
          %v1307 = vmul.f32 %v1259, %v1259
          %v1308 = vmul.f32 %v1260, %v1260
          %v1309 = vmul.f32 %v1261, %v1261
          %v1310 = vadd.f32 %v1302, %v1303
          %1311 = vadd.xlane.f32.xlu0 %v1310
          %v1312 = vpop.xlane.xlu0 %1311
          %v1313 = vadd.f32 %v1304, %v1305
          %1314 = vadd.xlane.f32.xlu0 %v1313
          %v1315 = vpop.xlane.xlu0 %1314
          %v1316 = vadd.f32 %v1306, %v1307
          %1317 = vadd.xlane.f32.xlu0 %v1316
          %v1318 = vpop.xlane.xlu0 %1317
          %v1319 = vadd.f32 %v1308, %v1309
          %1320 = vadd.xlane.f32.xlu0 %v1319
          %v1321 = vpop.xlane.xlu0 %1320
          %v1322 = vmul.f32 %v1292, %v1312
          %v1323 = vmul.f32 %v1295, %v1315
          %v1324 = vmul.f32 %v1298, %v1318
          %v1325 = vmul.f32 %v1301, %v1321
          %v1326 = vmax.f32 %v1322, 1e-16
          %v1327 = vmax.f32 %v1323, 1e-16
          %v1328 = vmax.f32 %v1324, 1e-16
          %v1329 = vmax.f32 %v1325, 1e-16
          %v1330 = vrsqrt.pop %v1326
          %v1331 = vrsqrt.pop %v1327
          %v1332 = vrsqrt.pop %v1328
          %v1333 = vrsqrt.pop %v1329
          %v1334 = vmul.f32 %v1272, %v1330
          %v1335 = vmul.f32 %v1275, %v1331
          %v1336 = vmul.f32 %v1278, %v1332
          %v1337 = vmul.f32 %v1281, %v1333
          %v1338 = vsub.f32 0.0, %v1334
          %v1339 = vsub.f32 0.0, %v1335
          %v1340 = vsub.f32 0.0, %v1336
          %v1341 = vsub.f32 0.0, %v1337
          %v1342 = vmul.f32 %v1220, %v1242
          %v1343 = vmul.f32 %v1222, %v1243
          %v1344 = vmul.f32 %v1224, %v1244
          %v1345 = vmul.f32 %v1226, %v1245
          %v1346 = vmul.f32 %v1230, %v1246
          %v1347 = vmul.f32 %v1232, %v1247
          %v1348 = vmul.f32 %v1234, %v1248
          %v1349 = vmul.f32 %v1236, %v1249
          %v1350 = vadd.f32 %v1342, %v1343
          %1351 = vadd.xlane.f32.xlu0 %v1350
          %v1352 = vpop.xlane.xlu0 %1351
          %v1353 = vadd.f32 %v1344, %v1345
          %1354 = vadd.xlane.f32.xlu0 %v1353
          %v1355 = vpop.xlane.xlu0 %1354
          %v1356 = vadd.f32 %v1346, %v1347
          %1357 = vadd.xlane.f32.xlu0 %v1356
          %v1358 = vpop.xlane.xlu0 %1357
          %v1359 = vadd.f32 %v1348, %v1349
          %1360 = vadd.xlane.f32.xlu0 %v1359
          %v1361 = vpop.xlane.xlu0 %1360
          %v1362 = vmul.f32 %v1220, %v1220
          %v1363 = vmul.f32 %v1222, %v1222
          %v1364 = vmul.f32 %v1224, %v1224
          %v1365 = vmul.f32 %v1226, %v1226
          %v1366 = vmul.f32 %v1230, %v1230
          %v1367 = vmul.f32 %v1232, %v1232
          %v1368 = vmul.f32 %v1234, %v1234
          %v1369 = vmul.f32 %v1236, %v1236
          %v1370 = vadd.f32 %v1362, %v1363
          %1371 = vadd.xlane.f32.xlu0 %v1370
          %v1372 = vpop.xlane.xlu0 %1371
          %v1373 = vadd.f32 %v1364, %v1365
          %1374 = vadd.xlane.f32.xlu0 %v1373
          %v1375 = vpop.xlane.xlu0 %1374
          %v1376 = vadd.f32 %v1366, %v1367
          %1377 = vadd.xlane.f32.xlu0 %v1376
          %v1378 = vpop.xlane.xlu0 %1377
          %v1379 = vadd.f32 %v1368, %v1369
          %1380 = vadd.xlane.f32.xlu0 %v1379
          %v1381 = vpop.xlane.xlu0 %1380
          %v1382 = vmul.f32 %v1242, %v1242
          %v1383 = vmul.f32 %v1243, %v1243
          %v1384 = vmul.f32 %v1244, %v1244
          %v1385 = vmul.f32 %v1245, %v1245
          %v1386 = vmul.f32 %v1246, %v1246
          %v1387 = vmul.f32 %v1247, %v1247
          %v1388 = vmul.f32 %v1248, %v1248
          %v1389 = vmul.f32 %v1249, %v1249
          %v1390 = vadd.f32 %v1382, %v1383
          %1391 = vadd.xlane.f32.xlu0 %v1390
          %v1392 = vpop.xlane.xlu0 %1391
          %v1393 = vadd.f32 %v1384, %v1385
          %1394 = vadd.xlane.f32.xlu0 %v1393
          %v1395 = vpop.xlane.xlu0 %1394
          %v1396 = vadd.f32 %v1386, %v1387
          %1397 = vadd.xlane.f32.xlu0 %v1396
          %v1398 = vpop.xlane.xlu0 %1397
          %v1399 = vadd.f32 %v1388, %v1389
          %1400 = vadd.xlane.f32.xlu0 %v1399
          %v1401 = vpop.xlane.xlu0 %1400
          %v1402 = vmul.f32 %v1372, %v1392
          %v1403 = vmul.f32 %v1375, %v1395
          %v1404 = vmul.f32 %v1378, %v1398
          %v1405 = vmul.f32 %v1381, %v1401
          %v1406 = vmax.f32 %v1402, 1e-16
          %v1407 = vmax.f32 %v1403, 1e-16
          %v1408 = vmax.f32 %v1404, 1e-16
          %v1409 = vmax.f32 %v1405, 1e-16
          %v1410 = vrsqrt.pop %v1406
          %v1411 = vrsqrt.pop %v1407
          %v1412 = vrsqrt.pop %v1408
          %v1413 = vrsqrt.pop %v1409
          %v1414 = vmul.f32 %v1352, %v1410
          %v1415 = vmul.f32 %v1355, %v1411
          %v1416 = vmul.f32 %v1358, %v1412
          %v1417 = vmul.f32 %v1361, %v1413
          %v1418 = vsub.f32 0.0, %v1414
          %v1419 = vsub.f32 0.0, %v1415
          %v1420 = vsub.f32 0.0, %v1416
          %v1421 = vsub.f32 0.0, %v1417
          %s1422 = sld [smem:[#allocation6]]
          %vm1423 = vcmask 7168
          %v1424 = vsel %vm1423, %v1338, 0.0
          %v1425 = vsel %vm1423, %v1339, 0.0
          %v1426 = vadd.f32 %v1424, %v1425
          %v1427 = vsel %vm1423, %v1340, 0.0
          %v1428 = vadd.f32 %v1426, %v1427
          %v1429 = vsel %vm1423, %v1341, 0.0
          %v1430 = vadd.f32 %v1428, %v1429
          %1431 = vadd.xlane.f32.xlu0 %v1430
          %v1432 = vpop.xlane.xlu0 %1431
          %v1433 = vrot.slane %v1432, 4
          %v1434 = vadd.f32 %v1432, %v1433
          %v1435 = vrot.slane %v1434, 2
          %v1436 = vadd.f32 %v1434, %v1435
          %v1437 = vrot.slane %v1436, 1
          %v1438 = vadd.f32 %v1436, %v1437
          %s1439 = vtos %v1438
          %s1440 = sadd.f32 %s1422, %s1439
          %s1441 = scalar_lea.smem [#allocation6], 0
          %1442 = sst [smem:[%s1441]] %s1440
          %s1443 = sld [smem:[#allocation6 + $0x1]]
          %v1444 = vsel %vm1423, %v1418, 0.0
          %v1445 = vsel %vm1423, %v1419, 0.0
          %v1446 = vadd.f32 %v1444, %v1445
          %v1447 = vsel %vm1423, %v1420, 0.0
          %v1448 = vadd.f32 %v1446, %v1447
          %v1449 = vsel %vm1423, %v1421, 0.0
          %v1450 = vadd.f32 %v1448, %v1449
          %1451 = vadd.xlane.f32.xlu0 %v1450
          %v1452 = vpop.xlane.xlu0 %1451
          %v1453 = vrot.slane %v1452, 4
          %v1454 = vadd.f32 %v1452, %v1453
          %v1455 = vrot.slane %v1454, 2
          %v1456 = vadd.f32 %v1454, %v1455
          %v1457 = vrot.slane %v1456, 1
          %v1458 = vadd.f32 %v1456, %v1457
          %s1459 = vtos %v1458
          %s1460 = sadd.f32 %s1443, %s1459
          %s1461 = scalar_lea.smem [#allocation6], 1
          %1462 = sst [smem:[%s1461]] %s1460
          %s1463 = sld [smem:[#allocation6 + $0x2]]
          %v1464 = vmul.f32 %v1338, %v1338
          %v1465 = vmul.f32 %v1339, %v1339
          %v1466 = vmul.f32 %v1340, %v1340
          %v1467 = vmul.f32 %v1341, %v1341
          %v1468 = vsel %vm1423, %v1464, 0.0
          %v1469 = vsel %vm1423, %v1465, 0.0
          %v1470 = vadd.f32 %v1468, %v1469
          %v1471 = vsel %vm1423, %v1466, 0.0
          %v1472 = vadd.f32 %v1470, %v1471
          %v1473 = vsel %vm1423, %v1467, 0.0
          %v1474 = vadd.f32 %v1472, %v1473
          %1475 = vadd.xlane.f32.xlu0 %v1474
          %v1476 = vpop.xlane.xlu0 %1475
          %v1477 = vrot.slane %v1476, 4
          %v1478 = vadd.f32 %v1476, %v1477
          %v1479 = vrot.slane %v1478, 2
          %v1480 = vadd.f32 %v1478, %v1479
          %v1481 = vrot.slane %v1480, 1
          %v1482 = vadd.f32 %v1480, %v1481
          %s1483 = vtos %v1482
          %s1484 = sadd.f32 %s1463, %s1483
          %s1485 = scalar_lea.smem [#allocation6], 2
          %1486 = sst [smem:[%s1485]] %s1484
          %v1487 = vadd.f32 %v1242, %v1243
          %1488 = vadd.xlane.f32.xlu0 %v1487
          %v1489 = vpop.xlane.xlu0 %1488
          %v1490 = vadd.f32 %v1244, %v1245
          %1491 = vadd.xlane.f32.xlu0 %v1490
          %v1492 = vpop.xlane.xlu0 %1491
          %v1493 = vadd.f32 %v1246, %v1247
          %1494 = vadd.xlane.f32.xlu0 %v1493
          %v1495 = vpop.xlane.xlu0 %1494
          %v1496 = vadd.f32 %v1248, %v1249
          %1497 = vadd.xlane.f32.xlu0 %v1496
          %v1498 = vpop.xlane.xlu0 %1497
          %v1499 = vrcp.pop 256.0
          %v1500 = vmul.f32 %v1489, %v1499
          %v1501 = vmul.f32 %v1492, %v1499
          %v1502 = vmul.f32 %v1495, %v1499
          %v1503 = vmul.f32 %v1498, %v1499
          %v1504 = vsub.f32 %v1242, %v1500
          %v1505 = vsub.f32 %v1243, %v1500
          %v1506 = vsub.f32 %v1244, %v1501
          %v1507 = vsub.f32 %v1245, %v1501
          %v1508 = vsub.f32 %v1246, %v1502
          %v1509 = vsub.f32 %v1247, %v1502
          %v1510 = vsub.f32 %v1248, %v1503
          %v1511 = vsub.f32 %v1249, %v1503
          %v1512 = vmul.f32 %v1504, %v1504
          %v1513 = vmul.f32 %v1505, %v1505
          %v1514 = vmul.f32 %v1506, %v1506
          %v1515 = vmul.f32 %v1507, %v1507
          %v1516 = vmul.f32 %v1508, %v1508
          %v1517 = vmul.f32 %v1509, %v1509
          %v1518 = vmul.f32 %v1510, %v1510
          %v1519 = vmul.f32 %v1511, %v1511
          %v1520 = vadd.f32 %v1512, %v1513
          %1521 = vadd.xlane.f32.xlu0 %v1520
          %v1522 = vpop.xlane.xlu0 %1521
          %v1523 = vadd.f32 %v1514, %v1515
          %1524 = vadd.xlane.f32.xlu0 %v1523
          %v1525 = vpop.xlane.xlu0 %1524
          %v1526 = vadd.f32 %v1516, %v1517
          %1527 = vadd.xlane.f32.xlu0 %v1526
          %v1528 = vpop.xlane.xlu0 %1527
          %v1529 = vadd.f32 %v1518, %v1519
          %1530 = vadd.xlane.f32.xlu0 %v1529
          %v1531 = vpop.xlane.xlu0 %1530
          %v1532 = vmul.f32 %v1522, 0.003921569
          %v1533 = vmul.f32 %v1525, 0.003921569
          %v1534 = vmul.f32 %v1528, 0.003921569
          %v1535 = vmul.f32 %v1531, 0.003921569
          %s1536 = sld [smem:[#allocation6 + $0x3]]
          %v1537 = vrsqrt.pop %v1532
          %v1538 = vmul.f32 %v1532, %v1537
          %vm1539 = vcmp.eq.f32.partialorder %v1532, inf
          %v1540 = vsel %vm1539, %v1532, %v1538
          %vm1541 = vcmp.eq.f32.partialorder %v1532, 0.0
          %v1542 = vand.u32 %v1532, 2147483648
          %v1543 = vsel %vm1541, %v1542, %v1540
          %v1544 = vrsqrt.pop %v1533
          %v1545 = vmul.f32 %v1533, %v1544
          %vm1546 = vcmp.eq.f32.partialorder %v1533, inf
          %v1547 = vsel %vm1546, %v1533, %v1545
          %vm1548 = vcmp.eq.f32.partialorder %v1533, 0.0
          %v1549 = vand.u32 %v1533, 2147483648
          %v1550 = vsel %vm1548, %v1549, %v1547
          %v1551 = vrsqrt.pop %v1534
          %v1552 = vmul.f32 %v1534, %v1551
          %vm1553 = vcmp.eq.f32.partialorder %v1534, inf
          %v1554 = vsel %vm1553, %v1534, %v1552
          %vm1555 = vcmp.eq.f32.partialorder %v1534, 0.0
          %v1556 = vand.u32 %v1534, 2147483648
          %v1557 = vsel %vm1555, %v1556, %v1554
          %v1558 = vrsqrt.pop %v1535
          %v1559 = vmul.f32 %v1535, %v1558
          %vm1560 = vcmp.eq.f32.partialorder %v1535, inf
          %v1561 = vsel %vm1560, %v1535, %v1559
          %vm1562 = vcmp.eq.f32.partialorder %v1535, 0.0
          %v1563 = vand.u32 %v1535, 2147483648
          %v1564 = vsel %vm1562, %v1563, %v1561
          %v1565 = vsel %vm1423, %v1543, 0.0
          %v1566 = vsel %vm1423, %v1550, 0.0
          %v1567 = vadd.f32 %v1565, %v1566
          %v1568 = vsel %vm1423, %v1557, 0.0
          %v1569 = vadd.f32 %v1567, %v1568
          %v1570 = vsel %vm1423, %v1564, 0.0
          %v1571 = vadd.f32 %v1569, %v1570
          %1572 = vadd.xlane.f32.xlu0 %v1571
          %v1573 = vpop.xlane.xlu0 %1572
          %v1574 = vrot.slane %v1573, 4
          %v1575 = vadd.f32 %v1573, %v1574
          %v1576 = vrot.slane %v1575, 2
          %v1577 = vadd.f32 %v1575, %v1576
          %v1578 = vrot.slane %v1577, 1
          %v1579 = vadd.f32 %v1577, %v1578
          %s1580 = vtos %v1579
          %s1581 = sadd.f32 %s1536, %s1580
          %s1582 = scalar_lea.smem [#allocation6], 3
          %1583 = sst [smem:[%s1582]] %s1581
          %s1584 = sld [smem:[#allocation6 + $0x4]]
          %v1585 = vsel %vm1423, %v1500, 0.0
          %v1586 = vsel %vm1423, %v1501, 0.0
          %v1587 = vadd.f32 %v1585, %v1586
          %v1588 = vsel %vm1423, %v1502, 0.0
          %v1589 = vadd.f32 %v1587, %v1588
          %v1590 = vsel %vm1423, %v1503, 0.0
          %v1591 = vadd.f32 %v1589, %v1590
          %1592 = vadd.xlane.f32.xlu0 %v1591
          %v1593 = vpop.xlane.xlu0 %1592
          %v1594 = vrot.slane %v1593, 4
          %v1595 = vadd.f32 %v1593, %v1594
          %v1596 = vrot.slane %v1595, 2
          %v1597 = vadd.f32 %v1595, %v1596
          %v1598 = vrot.slane %v1597, 1
          %v1599 = vadd.f32 %v1597, %v1598
          %s1600 = vtos %v1599
          %s1601 = sadd.f32 %s1584, %s1600
          %s1602 = scalar_lea.smem [#allocation6], 4
          %1603 = sst [smem:[%s1602]] %s1601
          %p1604 = scmp.eq.s32.totalorder %s29, 1
          // Predicated region
          $region69: #{tpu_custom_call.1} parent=67 // pred_check
            %p1605 = pneg %p1604
          $region70: #{tpu_custom_call.1} parent=67 // pred_check_branch
            %1607 = sbr.rel (%p1605) target = $region72
          $region71: #{tpu_custom_call.1} parent=67 // pred_region
            %s1608 = sld [smem:[#allocation6]]
            %s1609 = sld [smem:[#allocation6 + $0x1]]
            %s1610 = sld [smem:[#allocation6 + $0x2]]
            %s1611 = smul.f32 %s1608, 0.015625
            %s1612 = smul.f32 %s1611, 0.5
            %s1613 = smul.f32 %s1609, 0.015625
            %s1614 = smul.f32 %s1613, 0.5
            %s1615 = sadd.f32 %s1612, %s1614
            %s1616 = smul.f32 %s1608, %s1611
            %s1617 = ssub.f32 %s1610, %s1616
            %s1618 = smax.f32 %s1617, 0.0
            %s1619 = smul.f32 %s1618, 0.015873017
            %s1620 = scalar_lea.smem [#allocation15], 0
            %1621 = sst [smem:[%s1620]] %s1615
            %s1622 = scalar_lea.smem [#allocation15], 1
            %1623 = sst [smem:[%s1622]] %s1619
            %s1624 = sld [smem:[#allocation6 + $0x3]]
            %s1625 = smul.f32 %s1624, 0.015625
            %s1626 = scalar_lea.smem [#allocation15], 2
            %1627 = sst [smem:[%s1626]] %s1625
            %s1628 = sld [smem:[#allocation6 + $0x4]]
            %s1629 = smul.f32 %s1628, 0.015625
            %s1630 = scalar_lea.smem [#allocation15], 3
            %1631 = sst [smem:[%s1630]] %s1629
          $region72: #{tpu_custom_call.1} parent=67 // pred_fallthru
            _
        $region68: #{tpu_custom_call.1} parent=39 // pred_fallthru
          _
        // Predicated region
        $region73: #{tpu_custom_call.1} parent=39 // pred_check
          %p1632 = pneg %p164
        $region74: #{tpu_custom_call.1} parent=39 // pred_check_branch
          %1634 = sbr.rel (%p1632) target = $region76
        $region75: #{tpu_custom_call.1} parent=39 // pred_region
          %s1636 = ssub.s32 16, 16
          %1637 = vsyncadd [#allocation9], %s1636
          %1640 = dma.smem_to_hbm [#allocation15], 16, %s5, [#allocation9]
        $region76: #{tpu_custom_call.1} parent=39 // pred_fallthru
          _
        // Predicated region
        $region77: #{tpu_custom_call.1} parent=39 // pred_check
          %p1641 = pneg %p164
        $region78: #{tpu_custom_call.1} parent=39 // pred_check_branch
          %1643 = sbr.rel (%p1641) target = $region80
        $region79: #{tpu_custom_call.1} parent=39 // pred_region
          %1644 = dma.done [#allocation9], 16
        $region80: #{tpu_custom_call.1} parent=39 // pred_fallthru
          _
        %1645 = sfence
      $region40: #{tpu_custom_call.1} parent=5 // pred_fallthru
        _
      %p1646 = scmp.le.s32.totalorder 2, %s19
      // Predicated region
      $region81: #{tpu_custom_call.1} parent=5 // pred_check
        %p1647 = pneg %p1646
      $region82: #{tpu_custom_call.1} parent=5 // pred_check_branch
        %1649 = sbr.rel (%p1647) target = $region84
      $region83: #{tpu_custom_call.1} parent=5 // pred_region
        %s1650 = ssub.s32 %s19, 2
      $region84: #{tpu_custom_call.1} parent=5 // pred_fallthru
        _
    $region6: #{tpu_custom_call.1} parent=1 // loop_footer
      %s23 = sadd.s32 1, %s19
    $region7: #{tpu_custom_call.1} parent=1 // loop_footer_branch
      %18 = sbr.rel target = $region3
    $region8: #{tpu_custom_call.1} parent=1 // loop_exit
      _
    %1651 = vsyncpa [#allocation8], 1
    %s1652 = scalar_lea.sflag [#allocation8], 1
    %1653 = vsyncpa %s1652, 1
    %1654 = vsyncpa [#allocation11], 1
    %s1655 = scalar_lea.sflag [#allocation11], 1
    %1656 = vsyncpa %s1655, 1
    %1657 = vsyncpa [#allocation14], 1
    %1658 = vsyncpa [#allocation9], 1
    %s1659 = scalar_lea.sflag [#allocation9], 1
    %1660 = vsyncpa %s1659, 1

</llo_original>
